<compile_context>
chip_gen: v7x
topology: tpu7x:2x2x1
jax: 0.10.0
libtpu: 0.0.40
codegen_flags: <defaults>
</compile_context>

<pallas_src>
import functools

import jax
import jax.numpy as jnp
from jax.experimental import pallas as pl
from jax.experimental.pallas import tpu as pltpu

NEG_SLOPE = 0.01   # nn.LeakyReLU default
BN_EPS = 1e-5      # nn.BatchNorm2d default


# ------------------------------- helpers ----------------------------------- #

def _round_up(x, m):
    return (x + m - 1) // m * m


def _cparams(sems, est_bytes):
    # Explicit VMEM ceiling: comfortably above the per-step working set, but
    # capped at 48 MiB so the same tiling stays inside v7x's 64 MiB physical
    # VMEM (v5e/v6e have 128 MiB headroom anyway).
    return pltpu.CompilerParams(
        dimension_semantics=tuple(sems),
        vmem_limit_bytes=int(min(48 << 20, max(32 << 20, 4 * est_bytes))),
    )


# ----------------------------- Pallas kernels ------------------------------ #

def _stats_kernel(x_ref, ps_ref, acc_ref):
    """Per-channel (sum, sum^2) of one image, accumulated across lane tiles."""
    t = pl.program_id(1)
    x = x_ref[0]                                            # (C, TS)
    cur = jnp.concatenate(
        [jnp.sum(x, axis=1, keepdims=True),
         jnp.sum(x * x, axis=1, keepdims=True)], axis=1)    # (C, 2)

    @pl.when(t == 0)
    def _():
        acc_ref[...] = jnp.zeros_like(acc_ref)

    acc_ref[...] += cur

    @pl.when(t == pl.num_programs(1) - 1)
    def _():
        ps_ref[0] = acc_ref[...]


def _conv1_kernel(offs, x_ref, w_ref, b_ref, mask_ref, y_ref, ps_ref):
    """3x3 reflect-padded conv (bn0 folded into w/b) of one whole image.

    The 9 taps are fused into a single MXU matmul: the stacked RHS
    (9*Cin, L) is built from 9 lane-shifted slices of the flat padded image.
    Flat positions in the width padding are garbage; they are excluded from
    the BN statistics via `mask` and never reach the final output.
    """
    x = x_ref[0]                                            # (Cin_p, Lin)
    l_val = y_ref.shape[-1]
    xs = jnp.concatenate([x[:, d:d + l_val] for d in offs], axis=0)
    acc = jnp.dot(w_ref[...], xs,
                  preferred_element_type=jnp.float32) + b_ref[...]
    y_ref[0] = acc                                          # (Cout, L)
    av = acc * mask_ref[...]                                # mask pad columns
    ps_ref[0] = jnp.concatenate(
        [jnp.sum(av, axis=1, keepdims=True),
         jnp.sum(av * av, axis=1, keepdims=True)], axis=1)  # (Cout, 2)


def _conv2_kernel(y1_ref, mask_ref, a_ref, b_ref, w_ref, bias_ref,
                  y2_ref, ps_ref):
    """bn1 affine + LeakyReLU + 1x1 conv of one whole image."""
    z = a_ref[...] * y1_ref[0] + b_ref[...]                 # bn1 (batch stats)
    z = jnp.maximum(z, NEG_SLOPE * z)                       # LeakyReLU
    out = jnp.dot(w_ref[...], z,
                  preferred_element_type=jnp.float32) + bias_ref[...]
    y2_ref[0] = out
    ov = out * mask_ref[...]
    ps_ref[0] = jnp.concatenate(
        [jnp.sum(ov, axis=1, keepdims=True),
         jnp.sum(ov * ov, axis=1, keepdims=True)], axis=1)  # (Cout, 2)


def _up_kernel(w, y_ref, a_ref, b_ref, uw_ref, ub_ref, o_ref):
    """bn2 affine + LeakyReLU + exact bilinear x2 upsample of a channel block.

    Input rows are (channel, image-row) pairs, so both interpolation steps are
    plain lane-dense 2-D MXU matmuls (the H matrix is block-diagonal):
        out = kron(I_cb, Uh) @ (lrelu(a*y + b) @ Uw)
    """
    z = y_ref[0][:, :w] * a_ref[...] + b_ref[...]           # (cb*H, W)
    z = jnp.maximum(z, NEG_SLOPE * z)
    t = jnp.dot(z, uw_ref[...], preferred_element_type=jnp.float32)   # (cb*H, 2W)
    o_ref[0] = jnp.dot(ub_ref[...], t,
                       preferred_element_type=jnp.float32)            # (cb*2H, 2W)


# ------------------------------- wrappers ---------------------------------- #

def channel_batch_stats(x):
    """Per-channel batch mean and biased variance of an (N, C, H, W) tensor."""
    n, c, h, w = x.shape
    s = h * w
    ts = _round_up(s, 128)
    if c * ts * 4 > (4 << 20):       # fall back to lane tiles + VMEM accumulate
        ts = 2048
    n_t = pl.cdiv(s, ts)
    sp = n_t * ts
    x3 = jnp.pad(x.reshape(n, c, s), ((0, 0), (0, 0), (0, sp - s)))
    est = 4 * (2 * c * ts + 2 * c)
    ps = pl.pallas_call(
        _stats_kernel,
        grid=(n, n_t),
        in_specs=[pl.BlockSpec((1, c, ts), lambda i, t: (i, 0, t))],
        out_specs=pl.BlockSpec((1, c, 2), lambda i, t: (i, 0, 0)),
        out_shape=jax.ShapeDtypeStruct((n, c, 2), jnp.float32),
        scratch_shapes=[pltpu.VMEM((c, 2), jnp.float32)],
        compiler_params=_cparams(("parallel", "arbitrary"), est),
    )(x3)
    tot = jnp.sum(ps, axis=0)                               # (C, 2)
    cnt = float(n * s)
    mean = tot[:, 0] / cnt
    var = jnp.maximum(tot[:, 1] / cnt - mean * mean, 0.0)   # clamp fp cancel
    return mean, var


def conv1_bn0(x, w1, b1, a0, b0):
    """Reflect-padded 3x3 conv of the bn0-normalized input (bn0 folded in).

    Returns y1 in flat channels-first layout (N, Cout, L) with L = H*(W+2),
    per-image partial BN stats, the column-validity mask, and layout constants.
    """
    n, cin, h, w = x.shape
    cout = w1.shape[0]
    wp = w + 2
    l_val = h * wp                       # flat spatial length (incl. pad cols)
    halo = 2 * wp + 2                    # extra flat input needed by 3x3 taps
    lin = l_val + halo

    # fold bn0 per-channel affine (a0*x + b0) into the conv weights / bias
    w1f = w1 * a0[None, :, None, None]
    b1f = b1 + jnp.sum(w1 * b0[None, :, None, None], axis=(1, 2, 3))

    # pad Cin to a multiple of 8 so the in-kernel sublane stacking of the 9
    # taps is tile-aligned (zero channels x zero weights contribute nothing).
    cin_p = _round_up(cin, 8)
    if cin_p != cin:
        w1f = jnp.pad(w1f, ((0, 0), (0, cin_p - cin), (0, 0), (0, 0)))
        x = jnp.pad(x, ((0, 0), (0, cin_p - cin), (0, 0), (0, 0)))
    # (Cout, 9*Cin_p), column index = tap*Cin_p + ci (matches in-kernel stack)
    w_stack = jnp.transpose(w1f, (0, 2, 3, 1)).reshape(cout, 9 * cin_p)

    # reflect pad once and flatten the spatial dims; whole image per grid step
    # so there is no halo-duplicated gather and no extra HBM round trip.
    # TODO(synk): images whose per-image working set exceeds the VMEM budget
    # would need halo'd spatial tiling via manual make_async_copy.
    xp = jnp.pad(x, ((0, 0), (0, 0), (1, 1), (1, 1)), mode="reflect")
    xf = jnp.pad(xp.reshape(n, cin_p, (h + 2) * wp),
                 ((0, 0), (0, 0), (0, lin - (h + 2) * wp)))

    # tiny column-validity mask; constant block index => DMA'd once and
    # VMEM-resident for the whole call (not a per-step stream).
    pos = jnp.arange(l_val)
    mask = ((pos % wp) < w).astype(jnp.float32).reshape(1, l_val)

    offs = tuple(dr * wp + dc for dr in range(3) for dc in range(3))

    est = 4 * (2 * cin_p * lin + 2 * cout * l_val + 9 * cin_p * l_val
               + cout * 9 * cin_p + l_val + 4 * cout)
    y1, ps1 = pl.pallas_call(
        functools.partial(_conv1_kernel, offs),
        grid=(n,),
        in_specs=[
            pl.BlockSpec((1, cin_p, lin), lambda i: (i, 0, 0)),
            pl.BlockSpec((cout, 9 * cin_p), lambda i: (0, 0)),
            pl.BlockSpec((cout, 1), lambda i: (0, 0)),
            pl.BlockSpec((1, l_val), lambda i: (0, 0)),
        ],
        out_specs=[
            pl.BlockSpec((1, cout, l_val), lambda i: (i, 0, 0)),
            pl.BlockSpec((1, cout, 2), lambda i: (i, 0, 0)),
        ],
        out_shape=[
            jax.ShapeDtypeStruct((n, cout, l_val), jnp.float32),
            jax.ShapeDtypeStruct((n, cout, 2), jnp.float32),
        ],
        compiler_params=_cparams(("parallel",), est),
    )(xf, w_stack, b1f.reshape(cout, 1), mask)
    return y1, ps1, mask, wp, l_val


def conv2_bn1_lrelu(y1, mask, a1, b1, w2, bias2):
    n, cout, l_val = y1.shape
    est = 4 * (4 * cout * l_val + cout * cout + l_val + 6 * cout)
    y2, ps2 = pl.pallas_call(
        _conv2_kernel,
        grid=(n,),
        in_specs=[
            pl.BlockSpec((1, cout, l_val), lambda i: (i, 0, 0)),
            pl.BlockSpec((1, l_val), lambda i: (0, 0)),
            pl.BlockSpec((cout, 1), lambda i: (0, 0)),
            pl.BlockSpec((cout, 1), lambda i: (0, 0)),
            pl.BlockSpec((cout, cout), lambda i: (0, 0)),
            pl.BlockSpec((cout, 1), lambda i: (0, 0)),
        ],
        out_specs=[
            pl.BlockSpec((1, cout, l_val), lambda i: (i, 0, 0)),
            pl.BlockSpec((1, cout, 2), lambda i: (i, 0, 0)),
        ],
        out_shape=[
            jax.ShapeDtypeStruct((n, cout, l_val), jnp.float32),
            jax.ShapeDtypeStruct((n, cout, 2), jnp.float32),
        ],
        compiler_params=_cparams(("parallel",), est),
    )(y1, mask, a1.reshape(cout, 1), b1.reshape(cout, 1),
      w2, bias2.reshape(cout, 1))
    return y2, ps2


def _bilinear_matrix(length):
    """(L, 2L) matrix for scale-2 bilinear interpolation, align_corners=False
    (matches torch nn.Upsample(scale_factor=2, mode='bilinear') defaults)."""
    d = jnp.arange(2 * length, dtype=jnp.float32)
    src = jnp.maximum(0.5 * d - 0.25, 0.0)
    i0f = jnp.minimum(jnp.floor(src), float(length - 1))
    frac = src - i0f
    i0 = i0f.astype(jnp.int32)
    i1 = jnp.minimum(i0 + 1, length - 1)
    rows = jnp.arange(length, dtype=jnp.int32)[:, None]
    return ((rows == i0[None, :]).astype(jnp.float32) * (1.0 - frac)[None, :]
            + (rows == i1[None, :]).astype(jnp.float32) * frac[None, :])


def _pick_up_channel_block(cout, h, w, wp):
    """Largest channel block whose per-step VMEM footprint fits the budget."""
    budget = 8 << 20     # conservative so double-buffering fits v7x VMEM

    def cost(cb):
        blocks = cb * h * wp + cb * 2 * h * 2 * w           # in + out block
        consts = cb * cb * 2 * h * h + 2 * w * w + 2 * cb * h
        return 4 * (2 * blocks + consts)

    if cost(cout) <= budget:
        return cout
    best = 0
    for cb in range(1, cout):
        if cout % cb == 0 and (cb * h) % 8 == 0 and cost(cb) <= budget:
            best = cb
    return best if best > 0 else cout


def bn2_lrelu_upsample(y2, a2, b2, h, w, wp):
    n, cout, l_val = y2.shape
    assert l_val == h * wp
    # layout-preserving (free) reshape: rows become (channel, image-row) pairs
    y2r = y2.reshape(n, cout * h, wp)

    cb = _pick_up_channel_block(cout, h, w, wp)
    n_cb = cout // cb

    uw = _bilinear_matrix(w)                                 # (W, 2W)
    uh = _bilinear_matrix(h).T                               # (2H, H)
    ub = jnp.kron(jnp.eye(cb, dtype=jnp.float32), uh)        # (cb*2H, cb*H)
    a_rep = jnp.repeat(a2, h).reshape(cout * h, 1)
    b_rep = jnp.repeat(b2, h).reshape(cout * h, 1)

    est = 4 * (2 * cb * h * wp + 2 * cb * 2 * h * 2 * w
               + cb * cb * 2 * h * h + 2 * w * w + 4 * cb * h)
    out_flat = pl.pallas_call(
        functools.partial(_up_kernel, w),
        grid=(n, n_cb),
        in_specs=[
            pl.BlockSpec((1, cb * h, wp), lambda i, c: (i, c, 0)),
            pl.BlockSpec((cb * h, 1), lambda i, c: (c, 0)),
            pl.BlockSpec((cb * h, 1), lambda i, c: (c, 0)),
            pl.BlockSpec((w, 2 * w), lambda i, c: (0, 0)),
            pl.BlockSpec((cb * 2 * h, cb * h), lambda i, c: (0, 0)),
        ],
        out_specs=pl.BlockSpec((1, cb * 2 * h, 2 * w), lambda i, c: (i, c, 0)),
        out_shape=jax.ShapeDtypeStruct((n, cout * 2 * h, 2 * w), jnp.float32),
        compiler_params=_cparams(("parallel", "parallel"), est),
    )(y2r, a_rep, b_rep, uw, ub)
    return out_flat.reshape(n, cout, 2 * h, 2 * w)           # free reshape


# ------------------------------ full forward -------------------------------- #

def init_params(key, in_ch, out_ch):
    k1w, k1b, k2w, k2b = jax.random.split(key, 4)

    def conv_init(kw, kb, ci, co, ksz):
        bound = 1.0 / jnp.sqrt(ci * ksz * ksz * 1.0)
        wgt = jax.random.uniform(kw, (co, ci, ksz, ksz), jnp.float32, -bound, bound)
        bias = jax.random.uniform(kb, (co,), jnp.float32, -bound, bound)
        return wgt, bias

    w1, b1 = conv_init(k1w, k1b, in_ch, out_ch, 3)
    w2, b2 = conv_init(k2w, k2b, out_ch, out_ch, 1)
    return {
        "bn0_gamma": jnp.ones((in_ch,), jnp.float32),
        "bn0_beta": jnp.zeros((in_ch,), jnp.float32),
        "conv1_w": w1, "conv1_b": b1,
        "bn1_gamma": jnp.ones((out_ch,), jnp.float32),
        "bn1_beta": jnp.zeros((out_ch,), jnp.float32),
        "conv2_w": w2, "conv2_b": b2,
        "bn2_gamma": jnp.ones((out_ch,), jnp.float32),
        "bn2_beta": jnp.zeros((out_ch,), jnp.float32),
    }


def deconding_block_forward(params, x):
    """Forward pass of Deconding_Block (training-mode BatchNorm statistics)."""
    x = x.astype(jnp.float32)
    n, _, h, w = x.shape
    cnt = float(n * h * w)

    # bn0: batch statistics of the input (Pallas reduction), folded into conv1.
    mean0, var0 = channel_batch_stats(x)
    a0 = params["bn0_gamma"] * jax.lax.rsqrt(var0 + BN_EPS)
    b0 = params["bn0_beta"] - mean0 * a0

    # conv1 (3x3 reflect pad) with bn0 folded in; emits per-image y1 stats.
    y1, ps1, mask, wp, l_val = conv1_bn0(
        x, params["conv1_w"], params["conv1_b"], a0, b0)
    tot1 = jnp.sum(ps1, axis=0)
    mean1 = tot1[:, 0] / cnt
    var1 = jnp.maximum(tot1[:, 1] / cnt - mean1 * mean1, 0.0)
    a1 = params["bn1_gamma"] * jax.lax.rsqrt(var1 + BN_EPS)
    b1 = params["bn1_beta"] - mean1 * a1

    # bn1 + LeakyReLU + conv2 (1x1), fused; emits per-image y2 stats.
    w2 = params["conv2_w"][:, :, 0, 0]
    y2, ps2 = conv2_bn1_lrelu(y1, mask, a1, b1, w2, params["conv2_b"])
    tot2 = jnp.sum(ps2, axis=0)
    mean2 = tot2[:, 0] / cnt
    var2 = jnp.maximum(tot2[:, 1] / cnt - mean2 * mean2, 0.0)
    a2 = params["bn2_gamma"] * jax.lax.rsqrt(var2 + BN_EPS)
    b2 = params["bn2_beta"] - mean2 * a2

    # bn2 + LeakyReLU + exact bilinear x2 upsample, fused.
    # TODO(synk): BatchNorm running-mean/var buffer updates are not modelled
    # (they do not affect the forward output in training mode).
    return bn2_lrelu_upsample(y2, a2, b2, h, w, wp)


if __name__ == "__main__":
    key = jax.random.PRNGKey(0)
    kx, kp = jax.random.split(key)

    N, IN_CH, H, W = 2, 4, 16, 16
    OUT_CH = 8
    x = jax.random.normal(kx, (N, IN_CH, H, W), jnp.float32)
    params = init_params(kp, IN_CH, OUT_CH)

    fwd = jax.jit(deconding_block_forward)
    out = jax.block_until_ready(fwd(params, x))

    assert out.shape == (N, OUT_CH, 2 * H, 2 * W), out.shape
    assert out.dtype == jnp.float32
    assert bool(jnp.all(jnp.isfinite(out)))
    print("KERNEL_OK")
</pallas_src>

<mosaic_0001>
module attributes {stable_mosaic.version = 11 : i64} {
  func.func @_stats_kernel(%arg0: i32, %arg1: i32, %arg2: memref<1x4x256xf32, #tpu.memory_space<vmem>>, %arg3: memref<1x4x2xf32, #tpu.memory_space<vmem>>, %arg4: memref<4x2xf32, #tpu.memory_space<vmem>>) attributes {dimension_semantics = [#tpu.dimension_semantics<parallel>, #tpu.dimension_semantics<arbitrary>], iteration_bounds = array<i64: 2, 1>, scalar_prefetch = 0 : i64, scratch_operands = 1 : i64, tpu.core_type = #tpu.core_type<tc>, window_params = [{transform_indices = @transform_0, window_bounds = array<i64: 1, 4, 256>}, {transform_indices = @transform_1, window_bounds = array<i64: 1, 4, 2>}]} {
    %c0 = arith.constant 0 : index
    %c0_0 = arith.constant 0 : index
    %c0_1 = arith.constant 0 : index
    %0 = vector.load %arg2[%c0, %c0_0, %c0_1] : memref<1x4x256xf32, #tpu.memory_space<vmem>>, vector<1x4x256xf32>
    %1 = vector.shape_cast %0 : vector<1x4x256xf32> to vector<4x256xf32>
    %cst = arith.constant dense<0.000000e+00> : vector<4xf32>
    %2 = vector.multi_reduction <add>, %1, %cst [1] : vector<4x256xf32> to vector<4xf32>
    %3 = vector.shape_cast %2 : vector<4xf32> to vector<4x1xf32>
    %4 = arith.mulf %1, %1 : vector<4x256xf32>
    %cst_2 = arith.constant dense<0.000000e+00> : vector<4xf32>
    %5 = vector.multi_reduction <add>, %4, %cst_2 [1] : vector<4x256xf32> to vector<4xf32>
    %6 = vector.shape_cast %5 : vector<4xf32> to vector<4x1xf32>
    %7 = tpu.concatenate %3, %6 in 1 : vector<4x1xf32>, vector<4x1xf32> -> vector<4x2xf32>
    %c0_i32 = arith.constant 0 : i32
    %8 = arith.cmpi eq, %arg1, %c0_i32 : i32
    %9 = arith.extui %8 : i1 to i32
    %c0_i32_3 = arith.constant 0 : i32
    %10 = arith.cmpi ne, %9, %c0_i32_3 : i32
    scf.if %10 {
      %cst_10 = arith.constant 0.000000e+00 : f32
      %17 = vector.broadcast %cst_10 : f32 to vector<4x2xf32>
      %c0_11 = arith.constant 0 : index
      %c0_12 = arith.constant 0 : index
      %18 = vector.load %arg4[%c0_11, %c0_12] : memref<4x2xf32, #tpu.memory_space<vmem>>, vector<4x2xf32>
      tpu.vector_store %arg4[%c0_11, %c0_12], %17 {strides = array<i32>} : memref<4x2xf32, #tpu.memory_space<vmem>>, vector<4x2xf32>,
    } else {
    }
    %c0_4 = arith.constant 0 : index
    %c0_5 = arith.constant 0 : index
    %11 = vector.load %arg4[%c0_4, %c0_5] : memref<4x2xf32, #tpu.memory_space<vmem>>, vector<4x2xf32>
    %12 = arith.addf %11, %7 : vector<4x2xf32>
    %c0_6 = arith.constant 0 : index
    %c0_7 = arith.constant 0 : index
    %13 = vector.load %arg4[%c0_6, %c0_7] : memref<4x2xf32, #tpu.memory_space<vmem>>, vector<4x2xf32>
    tpu.vector_store %arg4[%c0_6, %c0_7], %12 {strides = array<i32>} : memref<4x2xf32, #tpu.memory_space<vmem>>, vector<4x2xf32>,
    %c0_i32_8 = arith.constant 0 : i32
    %14 = arith.cmpi eq, %arg1, %c0_i32_8 : i32
    %15 = arith.extui %14 : i1 to i32
    %c0_i32_9 = arith.constant 0 : i32
    %16 = arith.cmpi ne, %15, %c0_i32_9 : i32
    scf.if %16 {
      %c0_10 = arith.constant 0 : index
      %c0_11 = arith.constant 0 : index
      %17 = vector.load %arg4[%c0_10, %c0_11] : memref<4x2xf32, #tpu.memory_space<vmem>>, vector<4x2xf32>
      %c0_12 = arith.constant 0 : index
      %c0_13 = arith.constant 0 : index
      %c0_14 = arith.constant 0 : index
      %18 = vector.load %arg3[%c0_12, %c0_13, %c0_14] : memref<1x4x2xf32, #tpu.memory_space<vmem>>, vector<1x4x2xf32>
      %19 = vector.shape_cast %18 : vector<1x4x2xf32> to vector<4x2xf32>
      %20 = vector.shape_cast %17 : vector<4x2xf32> to vector<1x4x2xf32>
      tpu.vector_store %arg3[%c0_12, %c0_13, %c0_14], %20 {strides = array<i32>} : memref<1x4x2xf32, #tpu.memory_space<vmem>>, vector<1x4x2xf32>,
    } else {
    }
    return
  }
  func.func @transform_0(%arg0: i32, %arg1: i32) -> (i32, i32, i32) {
    %c0_i32 = arith.constant 0 : i32
    %c0_i32_0 = arith.constant 0 : i32
    return %arg0, %c0_i32, %arg1 : i32, i32, i32
  }
  func.func @transform_1(%arg0: i32, %arg1: i32) -> (i32, i32, i32) {
    %c0_i32 = arith.constant 0 : i32
    %c0_i32_0 = arith.constant 0 : i32
    %c0_i32_1 = arith.constant 0 : i32
    return %arg0, %c0_i32, %c0_i32_0 : i32, i32, i32
  }
}

module attributes {stable_mosaic.version = 11 : i64} {
  func.func @_conv1_kernel(%arg0: i32, %arg1: memref<1x8x326xf32, #tpu.memory_space<vmem>>, %arg2: memref<8x72xf32, #tpu.memory_space<vmem>>, %arg3: memref<8x1xf32, #tpu.memory_space<vmem>>, %arg4: memref<1x288xf32, #tpu.memory_space<vmem>>, %arg5: memref<1x8x288xf32, #tpu.memory_space<vmem>>, %arg6: memref<1x8x2xf32, #tpu.memory_space<vmem>>) attributes {dimension_semantics = [#tpu.dimension_semantics<parallel>], iteration_bounds = array<i64: 2>, scalar_prefetch = 0 : i64, scratch_operands = 0 : i64, tpu.core_type = #tpu.core_type<tc>, window_params = [{transform_indices = @transform_0, window_bounds = array<i64: 1, 8, 326>}, {pipeline_mode = #tpu.pipeline_mode<synchronous>, transform_indices = @transform_1, window_bounds = array<i64: 8, 72>}, {pipeline_mode = #tpu.pipeline_mode<synchronous>, transform_indices = @transform_2, window_bounds = array<i64: 8, 1>}, {pipeline_mode = #tpu.pipeline_mode<synchronous>, transform_indices = @transform_3, window_bounds = array<i64: 1, 288>}, {transform_indices = @transform_4, window_bounds = array<i64: 1, 8, 288>}, {transform_indices = @transform_5, window_bounds = array<i64: 1, 8, 2>}]} {
    %c0 = arith.constant 0 : index
    %c0_0 = arith.constant 0 : index
    %c0_1 = arith.constant 0 : index
    %0 = vector.load %arg1[%c0, %c0_0, %c0_1] : memref<1x8x326xf32, #tpu.memory_space<vmem>>, vector<1x8x326xf32>
    %1 = vector.shape_cast %0 : vector<1x8x326xf32> to vector<8x326xf32>
    %2 = vector.extract_strided_slice %1 {offsets = [0, 0], sizes = [8, 288], strides = [1, 1]} : vector<8x326xf32> to vector<8x288xf32>
    %3 = vector.extract_strided_slice %1 {offsets = [0, 1], sizes = [8, 288], strides = [1, 1]} : vector<8x326xf32> to vector<8x288xf32>
    %4 = vector.extract_strided_slice %1 {offsets = [0, 2], sizes = [8, 288], strides = [1, 1]} : vector<8x326xf32> to vector<8x288xf32>
    %5 = vector.extract_strided_slice %1 {offsets = [0, 18], sizes = [8, 288], strides = [1, 1]} : vector<8x326xf32> to vector<8x288xf32>
    %6 = vector.extract_strided_slice %1 {offsets = [0, 19], sizes = [8, 288], strides = [1, 1]} : vector<8x326xf32> to vector<8x288xf32>
    %7 = vector.extract_strided_slice %1 {offsets = [0, 20], sizes = [8, 288], strides = [1, 1]} : vector<8x326xf32> to vector<8x288xf32>
    %8 = vector.extract_strided_slice %1 {offsets = [0, 36], sizes = [8, 288], strides = [1, 1]} : vector<8x326xf32> to vector<8x288xf32>
    %9 = vector.extract_strided_slice %1 {offsets = [0, 37], sizes = [8, 288], strides = [1, 1]} : vector<8x326xf32> to vector<8x288xf32>
    %10 = vector.extract_strided_slice %1 {offsets = [0, 38], sizes = [8, 288], strides = [1, 1]} : vector<8x326xf32> to vector<8x288xf32>
    %11 = tpu.concatenate %2, %3, %4, %5, %6, %7, %8, %9, %10 in 0 : vector<8x288xf32>, vector<8x288xf32>, vector<8x288xf32>, vector<8x288xf32>, vector<8x288xf32>, vector<8x288xf32>, vector<8x288xf32>, vector<8x288xf32>, vector<8x288xf32> -> vector<72x288xf32>
    %c0_2 = arith.constant 0 : index
    %c0_3 = arith.constant 0 : index
    %12 = vector.load %arg2[%c0_2, %c0_3] : memref<8x72xf32, #tpu.memory_space<vmem>>, vector<8x72xf32>
    %cst = arith.constant dense<0.000000e+00> : vector<8x288xf32>
    %13 = tpu.matmul %12, %11, %cst {dimension_numbers = #tpu.dot_dimension_numbers<[1], [0], [0], [1], [0, 0, 1, 1], [], []>} : vector<8x72xf32>, vector<72x288xf32>, vector<8x288xf32> -> vector<8x288xf32>
    %c0_4 = arith.constant 0 : index
    %c0_5 = arith.constant 0 : index
    %14 = vector.load %arg3[%c0_4, %c0_5] : memref<8x1xf32, #tpu.memory_space<vmem>>, vector<8x1xf32>
    %15 = vector.broadcast %14 : vector<8x1xf32> to vector<8x288xf32>
    %16 = arith.addf %13, %15 : vector<8x288xf32>
    %c0_6 = arith.constant 0 : index
    %c0_7 = arith.constant 0 : index
    %c0_8 = arith.constant 0 : index
    %17 = vector.load %arg5[%c0_6, %c0_7, %c0_8] : memref<1x8x288xf32, #tpu.memory_space<vmem>>, vector<1x8x288xf32>
    %18 = vector.shape_cast %17 : vector<1x8x288xf32> to vector<8x288xf32>
    %19 = vector.shape_cast %16 : vector<8x288xf32> to vector<1x8x288xf32>
    tpu.vector_store %arg5[%c0_6, %c0_7, %c0_8], %19 {strides = array<i32>} : memref<1x8x288xf32, #tpu.memory_space<vmem>>, vector<1x8x288xf32>,
    %c0_9 = arith.constant 0 : index
    %c0_10 = arith.constant 0 : index
    %20 = vector.load %arg4[%c0_9, %c0_10] : memref<1x288xf32, #tpu.memory_space<vmem>>, vector<1x288xf32>
    %21 = vector.broadcast %20 : vector<1x288xf32> to vector<8x288xf32>
    %22 = arith.mulf %16, %21 : vector<8x288xf32>
    %cst_11 = arith.constant dense<0.000000e+00> : vector<8xf32>
    %23 = vector.multi_reduction <add>, %22, %cst_11 [1] : vector<8x288xf32> to vector<8xf32>
    %24 = vector.shape_cast %23 : vector<8xf32> to vector<8x1xf32>
    %25 = arith.mulf %22, %22 : vector<8x288xf32>
    %cst_12 = arith.constant dense<0.000000e+00> : vector<8xf32>
    %26 = vector.multi_reduction <add>, %25, %cst_12 [1] : vector<8x288xf32> to vector<8xf32>
    %27 = vector.shape_cast %26 : vector<8xf32> to vector<8x1xf32>
    %28 = tpu.concatenate %24, %27 in 1 : vector<8x1xf32>, vector<8x1xf32> -> vector<8x2xf32>
    %c0_13 = arith.constant 0 : index
    %c0_14 = arith.constant 0 : index
    %c0_15 = arith.constant 0 : index
    %29 = vector.load %arg6[%c0_13, %c0_14, %c0_15] : memref<1x8x2xf32, #tpu.memory_space<vmem>>, vector<1x8x2xf32>
    %30 = vector.shape_cast %29 : vector<1x8x2xf32> to vector<8x2xf32>
    %31 = vector.shape_cast %28 : vector<8x2xf32> to vector<1x8x2xf32>
    tpu.vector_store %arg6[%c0_13, %c0_14, %c0_15], %31 {strides = array<i32>} : memref<1x8x2xf32, #tpu.memory_space<vmem>>, vector<1x8x2xf32>,
    return
  }
  func.func @transform_0(%arg0: i32) -> (i32, i32, i32) {
    %c0_i32 = arith.constant 0 : i32
    %c0_i32_0 = arith.constant 0 : i32
    %c0_i32_1 = arith.constant 0 : i32
    return %arg0, %c0_i32, %c0_i32_0 : i32, i32, i32
  }
  func.func @transform_1(%arg0: i32) -> (i32, i32) {
    %c0_i32 = arith.constant 0 : i32
    %c0_i32_0 = arith.constant 0 : i32
    %c0_i32_1 = arith.constant 0 : i32
    return %c0_i32, %c0_i32_0 : i32, i32
  }
  func.func @transform_2(%arg0: i32) -> (i32, i32) {
    %c0_i32 = arith.constant 0 : i32
    %c0_i32_0 = arith.constant 0 : i32
    %c0_i32_1 = arith.constant 0 : i32
    return %c0_i32, %c0_i32_0 : i32, i32
  }
  func.func @transform_3(%arg0: i32) -> (i32, i32) {
    %c0_i32 = arith.constant 0 : i32
    %c0_i32_0 = arith.constant 0 : i32
    %c0_i32_1 = arith.constant 0 : i32
    return %c0_i32, %c0_i32_0 : i32, i32
  }
  func.func @transform_4(%arg0: i32) -> (i32, i32, i32) {
    %c0_i32 = arith.constant 0 : i32
    %c0_i32_0 = arith.constant 0 : i32
    %c0_i32_1 = arith.constant 0 : i32
    return %arg0, %c0_i32, %c0_i32_0 : i32, i32, i32
  }
  func.func @transform_5(%arg0: i32) -> (i32, i32, i32) {
    %c0_i32 = arith.constant 0 : i32
    %c0_i32_0 = arith.constant 0 : i32
    %c0_i32_1 = arith.constant 0 : i32
    return %arg0, %c0_i32, %c0_i32_0 : i32, i32, i32
  }
}

module attributes {stable_mosaic.version = 11 : i64} {
  func.func @_conv2_kernel(%arg0: i32, %arg1: memref<1x8x288xf32, #tpu.memory_space<vmem>>, %arg2: memref<1x288xf32, #tpu.memory_space<vmem>>, %arg3: memref<8x1xf32, #tpu.memory_space<vmem>>, %arg4: memref<8x1xf32, #tpu.memory_space<vmem>>, %arg5: memref<8x8xf32, #tpu.memory_space<vmem>>, %arg6: memref<8x1xf32, #tpu.memory_space<vmem>>, %arg7: memref<1x8x288xf32, #tpu.memory_space<vmem>>, %arg8: memref<1x8x2xf32, #tpu.memory_space<vmem>>) attributes {dimension_semantics = [#tpu.dimension_semantics<parallel>], iteration_bounds = array<i64: 2>, scalar_prefetch = 0 : i64, scratch_operands = 0 : i64, tpu.core_type = #tpu.core_type<tc>, window_params = [{transform_indices = @transform_0, window_bounds = array<i64: 1, 8, 288>}, {pipeline_mode = #tpu.pipeline_mode<synchronous>, transform_indices = @transform_1, window_bounds = array<i64: 1, 288>}, {pipeline_mode = #tpu.pipeline_mode<synchronous>, transform_indices = @transform_2, window_bounds = array<i64: 8, 1>}, {pipeline_mode = #tpu.pipeline_mode<synchronous>, transform_indices = @transform_3, window_bounds = array<i64: 8, 1>}, {pipeline_mode = #tpu.pipeline_mode<synchronous>, transform_indices = @transform_4, window_bounds = array<i64: 8, 8>}, {pipeline_mode = #tpu.pipeline_mode<synchronous>, transform_indices = @transform_5, window_bounds = array<i64: 8, 1>}, {transform_indices = @transform_6, window_bounds = array<i64: 1, 8, 288>}, {transform_indices = @transform_7, window_bounds = array<i64: 1, 8, 2>}]} {
    %c0 = arith.constant 0 : index
    %c0_0 = arith.constant 0 : index
    %0 = vector.load %arg3[%c0, %c0_0] : memref<8x1xf32, #tpu.memory_space<vmem>>, vector<8x1xf32>
    %c0_1 = arith.constant 0 : index
    %c0_2 = arith.constant 0 : index
    %c0_3 = arith.constant 0 : index
    %1 = vector.load %arg1[%c0_1, %c0_2, %c0_3] : memref<1x8x288xf32, #tpu.memory_space<vmem>>, vector<1x8x288xf32>
    %2 = vector.shape_cast %1 : vector<1x8x288xf32> to vector<8x288xf32>
    %3 = vector.broadcast %0 : vector<8x1xf32> to vector<8x288xf32>
    %4 = arith.mulf %3, %2 : vector<8x288xf32>
    %c0_4 = arith.constant 0 : index
    %c0_5 = arith.constant 0 : index
    %5 = vector.load %arg4[%c0_4, %c0_5] : memref<8x1xf32, #tpu.memory_space<vmem>>, vector<8x1xf32>
    %6 = vector.broadcast %5 : vector<8x1xf32> to vector<8x288xf32>
    %7 = arith.addf %4, %6 : vector<8x288xf32>
    %cst = arith.constant 0.00999999977 : f32
    %8 = vector.broadcast %cst : f32 to vector<8x288xf32>
    %9 = arith.mulf %8, %7 : vector<8x288xf32>
    %10 = arith.maximumf %7, %9 : vector<8x288xf32>
    %c0_6 = arith.constant 0 : index
    %c0_7 = arith.constant 0 : index
    %11 = vector.load %arg5[%c0_6, %c0_7] : memref<8x8xf32, #tpu.memory_space<vmem>>, vector<8x8xf32>
    %cst_8 = arith.constant dense<0.000000e+00> : vector<8x288xf32>
    %12 = tpu.matmul %11, %10, %cst_8 {dimension_numbers = #tpu.dot_dimension_numbers<[1], [0], [0], [1], [0, 0, 1, 1], [], []>} : vector<8x8xf32>, vector<8x288xf32>, vector<8x288xf32> -> vector<8x288xf32>
    %c0_9 = arith.constant 0 : index
    %c0_10 = arith.constant 0 : index
    %13 = vector.load %arg6[%c0_9, %c0_10] : memref<8x1xf32, #tpu.memory_space<vmem>>, vector<8x1xf32>
    %14 = vector.broadcast %13 : vector<8x1xf32> to vector<8x288xf32>
    %15 = arith.addf %12, %14 : vector<8x288xf32>
    %c0_11 = arith.constant 0 : index
    %c0_12 = arith.constant 0 : index
    %c0_13 = arith.constant 0 : index
    %16 = vector.load %arg7[%c0_11, %c0_12, %c0_13] : memref<1x8x288xf32, #tpu.memory_space<vmem>>, vector<1x8x288xf32>
    %17 = vector.shape_cast %16 : vector<1x8x288xf32> to vector<8x288xf32>
    %18 = vector.shape_cast %15 : vector<8x288xf32> to vector<1x8x288xf32>
    tpu.vector_store %arg7[%c0_11, %c0_12, %c0_13], %18 {strides = array<i32>} : memref<1x8x288xf32, #tpu.memory_space<vmem>>, vector<1x8x288xf32>,
    %c0_14 = arith.constant 0 : index
    %c0_15 = arith.constant 0 : index
    %19 = vector.load %arg2[%c0_14, %c0_15] : memref<1x288xf32, #tpu.memory_space<vmem>>, vector<1x288xf32>
    %20 = vector.broadcast %19 : vector<1x288xf32> to vector<8x288xf32>
    %21 = arith.mulf %15, %20 : vector<8x288xf32>
    %cst_16 = arith.constant dense<0.000000e+00> : vector<8xf32>
    %22 = vector.multi_reduction <add>, %21, %cst_16 [1] : vector<8x288xf32> to vector<8xf32>
    %23 = vector.shape_cast %22 : vector<8xf32> to vector<8x1xf32>
    %24 = arith.mulf %21, %21 : vector<8x288xf32>
    %cst_17 = arith.constant dense<0.000000e+00> : vector<8xf32>
    %25 = vector.multi_reduction <add>, %24, %cst_17 [1] : vector<8x288xf32> to vector<8xf32>
    %26 = vector.shape_cast %25 : vector<8xf32> to vector<8x1xf32>
    %27 = tpu.concatenate %23, %26 in 1 : vector<8x1xf32>, vector<8x1xf32> -> vector<8x2xf32>
    %c0_18 = arith.constant 0 : index
    %c0_19 = arith.constant 0 : index
    %c0_20 = arith.constant 0 : index
    %28 = vector.load %arg8[%c0_18, %c0_19, %c0_20] : memref<1x8x2xf32, #tpu.memory_space<vmem>>, vector<1x8x2xf32>
    %29 = vector.shape_cast %28 : vector<1x8x2xf32> to vector<8x2xf32>
    %30 = vector.shape_cast %27 : vector<8x2xf32> to vector<1x8x2xf32>
    tpu.vector_store %arg8[%c0_18, %c0_19, %c0_20], %30 {strides = array<i32>} : memref<1x8x2xf32, #tpu.memory_space<vmem>>, vector<1x8x2xf32>,
    return
  }
  func.func @transform_0(%arg0: i32) -> (i32, i32, i32) {
    %c0_i32 = arith.constant 0 : i32
    %c0_i32_0 = arith.constant 0 : i32
    %c0_i32_1 = arith.constant 0 : i32
    return %arg0, %c0_i32, %c0_i32_0 : i32, i32, i32
  }
  func.func @transform_1(%arg0: i32) -> (i32, i32) {
    %c0_i32 = arith.constant 0 : i32
    %c0_i32_0 = arith.constant 0 : i32
    %c0_i32_1 = arith.constant 0 : i32
    return %c0_i32, %c0_i32_0 : i32, i32
  }
  func.func @transform_2(%arg0: i32) -> (i32, i32) {
    %c0_i32 = arith.constant 0 : i32
    %c0_i32_0 = arith.constant 0 : i32
    %c0_i32_1 = arith.constant 0 : i32
    return %c0_i32, %c0_i32_0 : i32, i32
  }
  func.func @transform_3(%arg0: i32) -> (i32, i32) {
    %c0_i32 = arith.constant 0 : i32
    %c0_i32_0 = arith.constant 0 : i32
    %c0_i32_1 = arith.constant 0 : i32
    return %c0_i32, %c0_i32_0 : i32, i32
  }
  func.func @transform_4(%arg0: i32) -> (i32, i32) {
    %c0_i32 = arith.constant 0 : i32
    %c0_i32_0 = arith.constant 0 : i32
    %c0_i32_1 = arith.constant 0 : i32
    return %c0_i32, %c0_i32_0 : i32, i32
  }
  func.func @transform_5(%arg0: i32) -> (i32, i32) {
    %c0_i32 = arith.constant 0 : i32
    %c0_i32_0 = arith.constant 0 : i32
    %c0_i32_1 = arith.constant 0 : i32
    return %c0_i32, %c0_i32_0 : i32, i32
  }
  func.func @transform_6(%arg0: i32) -> (i32, i32, i32) {
    %c0_i32 = arith.constant 0 : i32
    %c0_i32_0 = arith.constant 0 : i32
    %c0_i32_1 = arith.constant 0 : i32
    return %arg0, %c0_i32, %c0_i32_0 : i32, i32, i32
  }
  func.func @transform_7(%arg0: i32) -> (i32, i32, i32) {
    %c0_i32 = arith.constant 0 : i32
    %c0_i32_0 = arith.constant 0 : i32
    %c0_i32_1 = arith.constant 0 : i32
    return %arg0, %c0_i32, %c0_i32_0 : i32, i32, i32
  }
}

module attributes {stable_mosaic.version = 11 : i64} {
  func.func @_up_kernel(%arg0: i32, %arg1: i32, %arg2: memref<1x128x18xf32, #tpu.memory_space<vmem>>, %arg3: memref<128x1xf32, #tpu.memory_space<vmem>>, %arg4: memref<128x1xf32, #tpu.memory_space<vmem>>, %arg5: memref<16x32xf32, #tpu.memory_space<vmem>>, %arg6: memref<256x128xf32, #tpu.memory_space<vmem>>, %arg7: memref<1x256x32xf32, #tpu.memory_space<vmem>>) attributes {dimension_semantics = [#tpu.dimension_semantics<parallel>, #tpu.dimension_semantics<parallel>], iteration_bounds = array<i64: 2, 1>, scalar_prefetch = 0 : i64, scratch_operands = 0 : i64, tpu.core_type = #tpu.core_type<tc>, window_params = [{transform_indices = @transform_0, window_bounds = array<i64: 1, 128, 18>}, {transform_indices = @transform_1, window_bounds = array<i64: 128, 1>}, {transform_indices = @transform_2, window_bounds = array<i64: 128, 1>}, {pipeline_mode = #tpu.pipeline_mode<synchronous>, transform_indices = @transform_3, window_bounds = array<i64: 16, 32>}, {pipeline_mode = #tpu.pipeline_mode<synchronous>, transform_indices = @transform_4, window_bounds = array<i64: 256, 128>}, {transform_indices = @transform_5, window_bounds = array<i64: 1, 256, 32>}]} {
    %c0 = arith.constant 0 : index
    %c0_0 = arith.constant 0 : index
    %c0_1 = arith.constant 0 : index
    %0 = vector.load %arg2[%c0, %c0_0, %c0_1] : memref<1x128x18xf32, #tpu.memory_space<vmem>>, vector<1x128x18xf32>
    %1 = vector.shape_cast %0 : vector<1x128x18xf32> to vector<128x18xf32>
    %2 = vector.extract_strided_slice %1 {offsets = [0, 0], sizes = [128, 16], strides = [1, 1]} : vector<128x18xf32> to vector<128x16xf32>
    %c0_2 = arith.constant 0 : index
    %c0_3 = arith.constant 0 : index
    %3 = vector.load %arg3[%c0_2, %c0_3] : memref<128x1xf32, #tpu.memory_space<vmem>>, vector<128x1xf32>
    %4 = vector.broadcast %3 : vector<128x1xf32> to vector<128x16xf32>
    %5 = arith.mulf %2, %4 : vector<128x16xf32>
    %c0_4 = arith.constant 0 : index
    %c0_5 = arith.constant 0 : index
    %6 = vector.load %arg4[%c0_4, %c0_5] : memref<128x1xf32, #tpu.memory_space<vmem>>, vector<128x1xf32>
    %7 = vector.broadcast %6 : vector<128x1xf32> to vector<128x16xf32>
    %8 = arith.addf %5, %7 : vector<128x16xf32>
    %cst = arith.constant 0.00999999977 : f32
    %9 = vector.broadcast %cst : f32 to vector<128x16xf32>
    %10 = arith.mulf %9, %8 : vector<128x16xf32>
    %11 = arith.maximumf %8, %10 : vector<128x16xf32>
    %c0_6 = arith.constant 0 : index
    %c0_7 = arith.constant 0 : index
    %12 = vector.load %arg5[%c0_6, %c0_7] : memref<16x32xf32, #tpu.memory_space<vmem>>, vector<16x32xf32>
    %cst_8 = arith.constant dense<0.000000e+00> : vector<128x32xf32>
    %13 = tpu.matmul %11, %12, %cst_8 {dimension_numbers = #tpu.dot_dimension_numbers<[1], [0], [0], [1], [0, 0, 1, 1], [], []>} : vector<128x16xf32>, vector<16x32xf32>, vector<128x32xf32> -> vector<128x32xf32>
    %c0_9 = arith.constant 0 : index
    %c0_10 = arith.constant 0 : index
    %14 = vector.load %arg6[%c0_9, %c0_10] : memref<256x128xf32, #tpu.memory_space<vmem>>, vector<256x128xf32>
    %cst_11 = arith.constant dense<0.000000e+00> : vector<256x32xf32>
    %15 = tpu.matmul %14, %13, %cst_11 {dimension_numbers = #tpu.dot_dimension_numbers<[1], [0], [0], [1], [0, 0, 1, 1], [], []>} : vector<256x128xf32>, vector<128x32xf32>, vector<256x32xf32> -> vector<256x32xf32>
    %c0_12 = arith.constant 0 : index
    %c0_13 = arith.constant 0 : index
    %c0_14 = arith.constant 0 : index
    %16 = vector.load %arg7[%c0_12, %c0_13, %c0_14] : memref<1x256x32xf32, #tpu.memory_space<vmem>>, vector<1x256x32xf32>
    %17 = vector.shape_cast %16 : vector<1x256x32xf32> to vector<256x32xf32>
    %18 = vector.shape_cast %15 : vector<256x32xf32> to vector<1x256x32xf32>
    tpu.vector_store %arg7[%c0_12, %c0_13, %c0_14], %18 {strides = array<i32>} : memref<1x256x32xf32, #tpu.memory_space<vmem>>, vector<1x256x32xf32>,
    return
  }
  func.func @transform_0(%arg0: i32, %arg1: i32) -> (i32, i32, i32) {
    %c0_i32 = arith.constant 0 : i32
    %c0_i32_0 = arith.constant 0 : i32
    return %arg0, %arg1, %c0_i32 : i32, i32, i32
  }
  func.func @transform_1(%arg0: i32, %arg1: i32) -> (i32, i32) {
    %c0_i32 = arith.constant 0 : i32
    %c0_i32_0 = arith.constant 0 : i32
    return %arg1, %c0_i32 : i32, i32
  }
  func.func @transform_2(%arg0: i32, %arg1: i32) -> (i32, i32) {
    %c0_i32 = arith.constant 0 : i32
    %c0_i32_0 = arith.constant 0 : i32
    return %arg1, %c0_i32 : i32, i32
  }
  func.func @transform_3(%arg0: i32, %arg1: i32) -> (i32, i32) {
    %c0_i32 = arith.constant 0 : i32
    %c0_i32_0 = arith.constant 0 : i32
    %c0_i32_1 = arith.constant 0 : i32
    return %c0_i32, %c0_i32_0 : i32, i32
  }
  func.func @transform_4(%arg0: i32, %arg1: i32) -> (i32, i32) {
    %c0_i32 = arith.constant 0 : i32
    %c0_i32_0 = arith.constant 0 : i32
    %c0_i32_1 = arith.constant 0 : i32
    return %c0_i32, %c0_i32_0 : i32, i32
  }
  func.func @transform_5(%arg0: i32, %arg1: i32) -> (i32, i32, i32) {
    %c0_i32 = arith.constant 0 : i32
    %c0_i32_0 = arith.constant 0 : i32
    return %arg0, %arg1, %c0_i32 : i32, i32, i32
  }
}

</mosaic_0001>

<llo_original>
// kernel: deconding_block_forward.4
$region0: #{deconding_block_forward.4}
  #allocation0 [shape = 'u32[]', space=smem, size = 0x4, offset = 0x4, fixed_abs, tag = 'smem constant byte address 0x4 - core index']
  #allocation1 [shape = 'u32[144,128]{1,0:T(1,128)}', space=vmem, size = 0x12000, scoped, tag = 'internal scratch']
  #allocation2 [shape = 'f32[4,2]{1,0:T(4,128)}', space=vmem, size = 0x800, scoped, tag = 'scratch operand']
  %s0 = inlined_call_operand.vmem [shape: f32[2,4,256], index: 0, kind: input, shape index: {}]
  %s1 = inlined_call_operand.vmem [shape: f32[2,4,2], index: 1, kind: output, shape index: {}]
  %s2 = sld [smem:[#allocation0]]
  $region45: #{deconding_block_forward.4} parent=0
    _
  %s4 = ssub.s32 1, %s2
  %s5 = scalar_select 0, %s4, %s2
  loop: start=0, step=1, limit=4
  $region2: #{deconding_block_forward.4} parent=0 // loop_pre_header
    _
  $region3: #{deconding_block_forward.4} parent=0 // loop_header
    %s7 = sphi 0, %s11
    %p8 = scmp.ge.s32.totalorder %s7, 4
    %s14 = sphi 0, %s26
    %s15 = sphi 0, %s22
    %s16 = sphi 0, %s14
    %s17 = sphi 0, %s15
    %s18 = sphi 0, %s16
    %s19 = sphi 0, %s17
    %s31 = sphi 0, %s33
    %s34 = sphi 0, %s31
    %s35 = sphi 0, %s34
    %s51 = sphi 0, %s35
    %s57 = sphi 0, %s59
    %s60 = sphi 0, %s57
    %s61 = sphi 0, %s60
    %s77 = sphi 0, %s61
  $region4: #{deconding_block_forward.4} parent=0 // loop_header_branch
    %10 = sbr.rel (%p8) target = $region8
  $region5: #{deconding_block_forward.4} parent=0 // loop_body
    %s12 = ssub.s32 %s7, 1
    %s13 = ssub.s32 %s7, 2
    %s20 = sadd.s32 1, %s15
    %p21 = scmp.ge.s32.totalorder %s20, 1
    %s22 = scalar_select %p21, 0, %s20
    %s23 = sadd.s32 1, %s14
    %s24 = scalar_select %p21, %s23, %s14
    %p25 = scmp.ge.s32.totalorder %s24, 2
    %s26 = scalar_select %p25, 0, %s24
    %s27 = ssub.s32 %s14, %s26
    %s28 = ssub.s32 %s15, %s22
    %s29 = sor.u32 %s27, %s28
    %p30 = scmp.eq.s32.totalorder %s29, 0
    %s32 = sadd.s32 %s31, 1
    %s33 = scalar_select %p30, %s31, %s32
    %p36 = pneg %p30
    %p37 = scmp.eq.s32.totalorder %s7, 1
    %p38 = por %p36, %p37
    %p39 = scmp.ne.s32.totalorder %s31, %s34
    %p40 = scmp.eq.s32.totalorder %s7, 0
    %p41 = por %p39, %p40
    %p42 = scmp.ne.s32.totalorder %s31, %s34
    %p43 = scmp.eq.s32.totalorder %s12, 1
    %p44 = por %p42, %p43
    %p45 = scmp.ne.s32.totalorder %s34, %s35
    %p46 = scmp.eq.s32.totalorder %s12, 0
    %p47 = por %p45, %p46
    %p48 = scmp.ne.s32.totalorder %s34, %s35
    %p49 = scmp.eq.s32.totalorder %s13, 1
    %p50 = por %p48, %p49
    %p52 = scmp.ne.s32.totalorder %s35, %s51
    %p53 = scmp.eq.s32.totalorder %s13, 0
    %p54 = por %p52, %p53
    %s55 = ssub.s32 %s14, %s26
    %p56 = scmp.eq.s32.totalorder %s55, 0
    %s58 = sadd.s32 %s57, 1
    %s59 = scalar_select %p56, %s57, %s58
    %p62 = pneg %p56
    %p63 = scmp.eq.s32.totalorder %s7, 1
    %p64 = por %p62, %p63
    %p65 = scmp.ne.s32.totalorder %s57, %s60
    %p66 = scmp.eq.s32.totalorder %s7, 0
    %p67 = por %p65, %p66
    %p68 = scmp.ne.s32.totalorder %s57, %s60
    %p69 = scmp.eq.s32.totalorder %s12, 1
    %p70 = por %p68, %p69
    %p71 = scmp.ne.s32.totalorder %s60, %s61
    %p72 = scmp.eq.s32.totalorder %s12, 0
    %p73 = por %p71, %p72
    %p74 = scmp.ne.s32.totalorder %s60, %s61
    %p75 = scmp.eq.s32.totalorder %s13, 1
    %p76 = por %p74, %p75
    %p78 = scmp.ne.s32.totalorder %s61, %s77
    %p79 = scmp.eq.s32.totalorder %s13, 0
    %p80 = por %p78, %p79
    %p81 = scmp.le.s32.totalorder 1, %s7
    %p82 = scmp.lt.s32.totalorder %s7, 3
    %p83 = pnand %p81, %p82
    %p84 = pneg %p83
    // Predicated region
    $region9: #{deconding_block_forward.4} parent=5 // pred_check
      _
    $region10: #{deconding_block_forward.4} parent=5 // pred_check_branch
      %86 = sbr.rel (%p83) target = $region12
    $region11: #{deconding_block_forward.4} parent=5 // pred_region
      %s87 = ssub.s32 %s7, 1
    $region12: #{deconding_block_forward.4} parent=5 // pred_fallthru
      _
    %p88 = scmp.lt.s32.totalorder %s7, 2
    // Predicated region
    $region13: #{deconding_block_forward.4} parent=5 // pred_check
      %p89 = pneg %p88
    $region14: #{deconding_block_forward.4} parent=5 // pred_check_branch
      %91 = sbr.rel (%p89) target = $region16
    $region15: #{deconding_block_forward.4} parent=5 // pred_region
      // Predicated region
      $region17: #{deconding_block_forward.4} parent=15 // pred_check
        %p92 = pneg %p41
      $region18: #{deconding_block_forward.4} parent=15 // pred_check_branch
        %94 = sbr.rel (%p92) target = $region20
      $region19: #{deconding_block_forward.4} parent=15 // pred_region
        %s95 = smul.u32 2, %s15
        %p96 = scmp.lt.s32.totalorder %s14, 1
        %s97 = scalar_select %p96, %s14, 1
        %p98 = scmp.lt.s32.totalorder %s95, 1
        %s99 = scalar_select %p98, %s95, 1
        %s100 = smul.addr %s97, 2
        %s101 = sadd.s32 %s99, %s100
        %s102 = smul.addr %s101, 4
        %s103 = scalar_lea.vmem %s0, %s102
        %s104 = smul.u32 2, %s15
      $region20: #{deconding_block_forward.4} parent=15 // pred_fallthru
        _
    $region16: #{deconding_block_forward.4} parent=5 // pred_fallthru
      _
    %p105 = scmp.le.s32.totalorder 1, %s7
    %p106 = scmp.lt.s32.totalorder %s7, 3
    %p107 = pnand %p105, %p106
    %p108 = pneg %p107
    // Predicated region
    $region21: #{deconding_block_forward.4} parent=5 // pred_check
      _
    $region22: #{deconding_block_forward.4} parent=5 // pred_check_branch
      %110 = sbr.rel (%p107) target = $region24
    $region23: #{deconding_block_forward.4} parent=5 // pred_region
      %s111 = ssub.s32 %s7, 1
      %s112 = smul.u32 2, %s17
      %p113 = scmp.lt.s32.totalorder %s16, 1
      %s114 = scalar_select %p113, %s16, 1
      %p115 = scmp.lt.s32.totalorder %s112, 1
      %s116 = scalar_select %p115, %s112, 1
      %s117 = smul.addr %s114, 2
      %s118 = sadd.s32 %s116, %s117
      %s119 = smul.addr %s118, 4
      %s120 = scalar_lea.vmem %s0, %s119
      %p121 = pneg %p47
      %p122 = pneg %p44
      %p123 = pneg %p73
      %p124 = pneg %p70
      %p125 = scmp.lt.s32.totalorder %s16, 1
      %s126 = scalar_select %p125, %s16, 1
      %s127 = smul.addr %s126, 4
      %s128 = scalar_lea.vmem %s1, %s127
      %s129 = smul.u32 2, %s17
      %p130 = scmp.lt.s32.totalorder %s16, 1
      %s131 = scalar_select %p130, %s16, 1
      %p132 = scmp.lt.s32.totalorder %s129, 1
      %s133 = scalar_select %p132, %s129, 1
      %s134 = smul.addr %s131, 2
      %s135 = sadd.s32 %s133, %s134
      %s136 = smul.addr %s135, 4
      %s137 = scalar_lea.vmem %s0, %s136
      %s138 = smul.u32 2, %s17
      %p139 = scmp.lt.s32.totalorder %s16, 1
      %s140 = scalar_select %p139, %s16, 1
      %s141 = smul.addr %s140, 4
      %s142 = scalar_lea.vmem %s1, %s141
      %v143 = vld [vmem:[%s137] sm:$0xff]
      %v145 = vcombine.high %v143, %v143
      %vm147 = vcmask 1043456
      %v148 = vsel %vm147, %v143, 0.0
      %v149 = vsel %vm147, %v145, 0.0
      %v150 = vadd.f32 %v148, %v149
      %151 = vadd.xlane.f32.xlu0 %v150
      %v152 = vpop.xlane.xlu0 %151
      %v153 = vmul.f32 %v143, %v143
      %v155 = vcombine.high %v153, %v153
      %v157 = vsel %vm147, %v153, 0.0
      %v158 = vsel %vm147, %v155, 0.0
      %v159 = vadd.f32 %v157, %v158
      %160 = vadd.xlane.f32.xlu0 %v159
      %v161 = vpop.xlane.xlu0 %160
      %vm162 = vcmask 7168
      %v163 = vsel %vm162, %v152, %v161
      %p164 = scmp.eq.s32.totalorder %s17, 0
      // Predicated region
      $region25: #{deconding_block_forward.4} parent=23 // pred_check
        %p165 = pneg %p164
      $region26: #{deconding_block_forward.4} parent=23 // pred_check_branch
        %167 = sbr.rel (%p165) target = $region28
      $region27: #{deconding_block_forward.4} parent=23 // pred_region
        %vm168 = vcmask 11264
        %169 = vst.msk [vmem:[#allocation2] sm:$0xf] %vm168, 0.0
      $region28: #{deconding_block_forward.4} parent=23 // pred_fallthru
        _
      %v170 = vld [vmem:[#allocation2] sm:$0xf]
      %v171 = vadd.f32 %v170, %v163
      %vm172 = vcmask 11264
      %173 = vst.msk [vmem:[#allocation2] sm:$0xf] %vm172, %v171
      // Predicated region
      $region29: #{deconding_block_forward.4} parent=23 // pred_check
        %p174 = pneg %p164
      $region30: #{deconding_block_forward.4} parent=23 // pred_check_branch
        %176 = sbr.rel (%p174) target = $region32
      $region31: #{deconding_block_forward.4} parent=23 // pred_region
        %v177 = vld [vmem:[#allocation2] sm:$0xf]
        %178 = vst.msk [vmem:[%s142] sm:$0xf] %vm172, %v177
      $region32: #{deconding_block_forward.4} parent=23 // pred_fallthru
        _
      %p179 = scmp.lt.s32.totalorder %s16, 1
      %s180 = scalar_select %p179, %s16, 1
      %s181 = smul.addr %s180, 4
      %s182 = scalar_lea.vmem %s1, %s181
      // Predicated region
      $region33: #{deconding_block_forward.4} parent=23 // pred_check
        %p183 = pneg %p70
      $region34: #{deconding_block_forward.4} parent=23 // pred_check_branch
        %185 = sbr.rel (%p183) target = $region36
      $region35: #{deconding_block_forward.4} parent=23 // pred_region
        _
      $region36: #{deconding_block_forward.4} parent=23 // pred_fallthru
        _
    $region24: #{deconding_block_forward.4} parent=5 // pred_fallthru
      _
    %p186 = scmp.le.s32.totalorder 2, %s7
    // Predicated region
    $region37: #{deconding_block_forward.4} parent=5 // pred_check
      %p187 = pneg %p186
    $region38: #{deconding_block_forward.4} parent=5 // pred_check_branch
      %189 = sbr.rel (%p187) target = $region40
    $region39: #{deconding_block_forward.4} parent=5 // pred_region
      %s190 = ssub.s32 %s7, 2
      // Predicated region
      $region41: #{deconding_block_forward.4} parent=39 // pred_check
        %p191 = pneg %p76
      $region42: #{deconding_block_forward.4} parent=39 // pred_check_branch
        %193 = sbr.rel (%p191) target = $region44
      $region43: #{deconding_block_forward.4} parent=39 // pred_region
        %p194 = scmp.lt.s32.totalorder %s18, 1
        %s195 = scalar_select %p194, %s18, 1
        %s196 = smul.addr %s195, 4
        %s197 = scalar_lea.vmem %s1, %s196
      $region44: #{deconding_block_forward.4} parent=39 // pred_fallthru
        _
    $region40: #{deconding_block_forward.4} parent=5 // pred_fallthru
      _
  $region6: #{deconding_block_forward.4} parent=0 // loop_footer
    %s11 = sadd.s32 1, %s7
  $region7: #{deconding_block_forward.4} parent=0 // loop_footer_branch
    %6 = sbr.rel target = $region3
  $region8: #{deconding_block_forward.4} parent=0 // loop_exit
    _

// kernel: deconding_block_forward.5
$region0: #{deconding_block_forward.5}
  #allocation0 [shape = 'u32[]', space=smem, size = 0x4, offset = 0x4, fixed_abs, tag = 'smem constant byte address 0x4 - core index']
  #allocation1 [shape = 'u32[144,128]{1,0:T(1,128)}', space=vmem, size = 0x12000, scoped, tag = 'internal scratch']
  %s0 = inlined_call_operand.vmem [shape: f32[2,8,326], index: 0, kind: input, shape index: {}]
  %s1 = inlined_call_operand.vmem [shape: f32[8,72], index: 1, kind: input, shape index: {}]
  %s2 = inlined_call_operand.vmem [shape: f32[8,1], index: 2, kind: input, shape index: {}]
  %s3 = inlined_call_operand.vmem [shape: f32[1,288], index: 3, kind: input, shape index: {}]
  %s4 = inlined_call_operand.vmem [shape: f32[2,8,288], index: 4, kind: output, shape index: {0}]
  %s5 = inlined_call_operand.vmem [shape: f32[2,8,2], index: 5, kind: output, shape index: {1}]
  %6 = xla_tuple %s4, %s5
  %s7 = sld [smem:[#allocation0]]
  $region57: #{deconding_block_forward.5} parent=0
    _
  %s9 = ssub.s32 1, %s7
  %s10 = scalar_select 0, %s9, %s7
  loop: start=0, step=1, limit=4
  $region2: #{deconding_block_forward.5} parent=0 // loop_pre_header
    _
  $region3: #{deconding_block_forward.5} parent=0 // loop_header
    %s12 = sphi 0, %s16
    %p13 = scmp.ge.s32.totalorder %s12, 4
    %s22 = sphi 0, %s24
    %s25 = sphi 0, %s22
    %s26 = sphi 0, %s25
    %s42 = sphi 0, %s26
    %s46 = sphi 0, %s46
    %s48 = sphi 0, %s46
    %s49 = sphi 0, %s48
    %s63 = sphi 0, %s49
    %s67 = sphi 0, %s67
    %s69 = sphi 0, %s67
    %s70 = sphi 0, %s69
    %s84 = sphi 0, %s70
    %s88 = sphi 0, %s88
    %s90 = sphi 0, %s88
    %s91 = sphi 0, %s90
    %s105 = sphi 0, %s91
    %s111 = sphi 0, %s113
    %s114 = sphi 0, %s111
    %s115 = sphi 0, %s114
    %s131 = sphi 0, %s115
    %s137 = sphi 0, %s139
    %s140 = sphi 0, %s137
    %s141 = sphi 0, %s140
    %s157 = sphi 0, %s141
  $region4: #{deconding_block_forward.5} parent=0 // loop_header_branch
    %15 = sbr.rel (%p13) target = $region8
  $region5: #{deconding_block_forward.5} parent=0 // loop_body
    %s17 = ssub.s32 %s12, 1
    %s18 = ssub.s32 %s12, 2
    %s19 = sadd.s32 %s12, 1
    %s20 = ssub.s32 %s12, %s19
    %p21 = scmp.eq.s32.totalorder %s20, 0
    %s23 = sadd.s32 %s22, 1
    %s24 = scalar_select %p21, %s22, %s23
    %p27 = pneg %p21
    %p28 = scmp.eq.s32.totalorder %s12, 1
    %p29 = por %p27, %p28
    %p30 = scmp.ne.s32.totalorder %s22, %s25
    %p31 = scmp.eq.s32.totalorder %s12, 0
    %p32 = por %p30, %p31
    %p33 = scmp.ne.s32.totalorder %s22, %s25
    %p34 = scmp.eq.s32.totalorder %s17, 1
    %p35 = por %p33, %p34
    %p36 = scmp.ne.s32.totalorder %s25, %s26
    %p37 = scmp.eq.s32.totalorder %s17, 0
    %p38 = por %p36, %p37
    %p39 = scmp.ne.s32.totalorder %s25, %s26
    %p40 = scmp.eq.s32.totalorder %s18, 1
    %p41 = por %p39, %p40
    %p43 = scmp.ne.s32.totalorder %s26, %s42
    %p44 = scmp.eq.s32.totalorder %s18, 0
    %p45 = por %p43, %p44
    %s47 = sadd.s32 %s46, 1
    %p50 = scmp.eq.s32.totalorder %s12, 1
    %p51 = scmp.ne.s32.totalorder %s46, %s48
    %p52 = scmp.eq.s32.totalorder %s12, 0
    %p53 = por %p51, %p52
    %p54 = scmp.ne.s32.totalorder %s46, %s48
    %p55 = scmp.eq.s32.totalorder %s17, 1
    %p56 = por %p54, %p55
    %p57 = scmp.ne.s32.totalorder %s48, %s49
    %p58 = scmp.eq.s32.totalorder %s17, 0
    %p59 = por %p57, %p58
    %p60 = scmp.ne.s32.totalorder %s48, %s49
    %p61 = scmp.eq.s32.totalorder %s18, 1
    %p62 = por %p60, %p61
    %p64 = scmp.ne.s32.totalorder %s49, %s63
    %p65 = scmp.eq.s32.totalorder %s18, 0
    %p66 = por %p64, %p65
    %s68 = sadd.s32 %s67, 1
    %p71 = scmp.eq.s32.totalorder %s12, 1
    %p72 = scmp.ne.s32.totalorder %s67, %s69
    %p73 = scmp.eq.s32.totalorder %s12, 0
    %p74 = por %p72, %p73
    %p75 = scmp.ne.s32.totalorder %s67, %s69
    %p76 = scmp.eq.s32.totalorder %s17, 1
    %p77 = por %p75, %p76
    %p78 = scmp.ne.s32.totalorder %s69, %s70
    %p79 = scmp.eq.s32.totalorder %s17, 0
    %p80 = por %p78, %p79
    %p81 = scmp.ne.s32.totalorder %s69, %s70
    %p82 = scmp.eq.s32.totalorder %s18, 1
    %p83 = por %p81, %p82
    %p85 = scmp.ne.s32.totalorder %s70, %s84
    %p86 = scmp.eq.s32.totalorder %s18, 0
    %p87 = por %p85, %p86
    %s89 = sadd.s32 %s88, 1
    %p92 = scmp.eq.s32.totalorder %s12, 1
    %p93 = scmp.ne.s32.totalorder %s88, %s90
    %p94 = scmp.eq.s32.totalorder %s12, 0
    %p95 = por %p93, %p94
    %p96 = scmp.ne.s32.totalorder %s88, %s90
    %p97 = scmp.eq.s32.totalorder %s17, 1
    %p98 = por %p96, %p97
    %p99 = scmp.ne.s32.totalorder %s90, %s91
    %p100 = scmp.eq.s32.totalorder %s17, 0
    %p101 = por %p99, %p100
    %p102 = scmp.ne.s32.totalorder %s90, %s91
    %p103 = scmp.eq.s32.totalorder %s18, 1
    %p104 = por %p102, %p103
    %p106 = scmp.ne.s32.totalorder %s91, %s105
    %p107 = scmp.eq.s32.totalorder %s18, 0
    %p108 = por %p106, %p107
    %s109 = ssub.s32 %s12, %s19
    %p110 = scmp.eq.s32.totalorder %s109, 0
    %s112 = sadd.s32 %s111, 1
    %s113 = scalar_select %p110, %s111, %s112
    %p116 = pneg %p110
    %p117 = scmp.eq.s32.totalorder %s12, 1
    %p118 = por %p116, %p117
    %p119 = scmp.ne.s32.totalorder %s111, %s114
    %p120 = scmp.eq.s32.totalorder %s12, 0
    %p121 = por %p119, %p120
    %p122 = scmp.ne.s32.totalorder %s111, %s114
    %p123 = scmp.eq.s32.totalorder %s17, 1
    %p124 = por %p122, %p123
    %p125 = scmp.ne.s32.totalorder %s114, %s115
    %p126 = scmp.eq.s32.totalorder %s17, 0
    %p127 = por %p125, %p126
    %p128 = scmp.ne.s32.totalorder %s114, %s115
    %p129 = scmp.eq.s32.totalorder %s18, 1
    %p130 = por %p128, %p129
    %p132 = scmp.ne.s32.totalorder %s115, %s131
    %p133 = scmp.eq.s32.totalorder %s18, 0
    %p134 = por %p132, %p133
    %s135 = ssub.s32 %s12, %s19
    %p136 = scmp.eq.s32.totalorder %s135, 0
    %s138 = sadd.s32 %s137, 1
    %s139 = scalar_select %p136, %s137, %s138
    %p142 = pneg %p136
    %p143 = scmp.eq.s32.totalorder %s12, 1
    %p144 = por %p142, %p143
    %p145 = scmp.ne.s32.totalorder %s137, %s140
    %p146 = scmp.eq.s32.totalorder %s12, 0
    %p147 = por %p145, %p146
    %p148 = scmp.ne.s32.totalorder %s137, %s140
    %p149 = scmp.eq.s32.totalorder %s17, 1
    %p150 = por %p148, %p149
    %p151 = scmp.ne.s32.totalorder %s140, %s141
    %p152 = scmp.eq.s32.totalorder %s17, 0
    %p153 = por %p151, %p152
    %p154 = scmp.ne.s32.totalorder %s140, %s141
    %p155 = scmp.eq.s32.totalorder %s18, 1
    %p156 = por %p154, %p155
    %p158 = scmp.ne.s32.totalorder %s141, %s157
    %p159 = scmp.eq.s32.totalorder %s18, 0
    %p160 = por %p158, %p159
    %p161 = scmp.le.s32.totalorder 1, %s12
    %p162 = scmp.lt.s32.totalorder %s12, 3
    %p163 = pnand %p161, %p162
    %p164 = pneg %p163
    // Predicated region
    $region9: #{deconding_block_forward.5} parent=5 // pred_check
      _
    $region10: #{deconding_block_forward.5} parent=5 // pred_check_branch
      %166 = sbr.rel (%p163) target = $region12
    $region11: #{deconding_block_forward.5} parent=5 // pred_region
      %s167 = ssub.s32 %s12, 1
      // Predicated region
      $region13: #{deconding_block_forward.5} parent=11 // pred_check
        %p168 = pneg %p59
      $region14: #{deconding_block_forward.5} parent=11 // pred_check_branch
        %170 = sbr.rel (%p168) target = $region16
      $region15: #{deconding_block_forward.5} parent=11 // pred_region
        _
      $region16: #{deconding_block_forward.5} parent=11 // pred_fallthru
        _
      // Predicated region
      $region17: #{deconding_block_forward.5} parent=11 // pred_check
        %p171 = pneg %p80
      $region18: #{deconding_block_forward.5} parent=11 // pred_check_branch
        %173 = sbr.rel (%p171) target = $region20
      $region19: #{deconding_block_forward.5} parent=11 // pred_region
        _
      $region20: #{deconding_block_forward.5} parent=11 // pred_fallthru
        _
      // Predicated region
      $region21: #{deconding_block_forward.5} parent=11 // pred_check
        %p174 = pneg %p101
      $region22: #{deconding_block_forward.5} parent=11 // pred_check_branch
        %176 = sbr.rel (%p174) target = $region24
      $region23: #{deconding_block_forward.5} parent=11 // pred_region
        _
      $region24: #{deconding_block_forward.5} parent=11 // pred_fallthru
        _
    $region12: #{deconding_block_forward.5} parent=5 // pred_fallthru
      _
    %p177 = scmp.lt.s32.totalorder %s12, 2
    // Predicated region
    $region25: #{deconding_block_forward.5} parent=5 // pred_check
      %p178 = pneg %p177
    $region26: #{deconding_block_forward.5} parent=5 // pred_check_branch
      %180 = sbr.rel (%p178) target = $region28
    $region27: #{deconding_block_forward.5} parent=5 // pred_region
      // Predicated region
      $region29: #{deconding_block_forward.5} parent=27 // pred_check
        %p181 = pneg %p32
      $region30: #{deconding_block_forward.5} parent=27 // pred_check_branch
        %183 = sbr.rel (%p181) target = $region32
      $region31: #{deconding_block_forward.5} parent=27 // pred_region
        %p184 = scmp.lt.s32.totalorder %s12, 1
        %s185 = scalar_select %p184, %s12, 1
        %s186 = smul.addr %s185, 3
        %s187 = smul.addr %s186, 8
        %s188 = scalar_lea.vmem %s0, %s187
      $region32: #{deconding_block_forward.5} parent=27 // pred_fallthru
        _
    $region28: #{deconding_block_forward.5} parent=5 // pred_fallthru
      _
    %p189 = scmp.le.s32.totalorder 1, %s12
    %p190 = scmp.lt.s32.totalorder %s12, 3
    %p191 = pnand %p189, %p190
    %p192 = pneg %p191
    // Predicated region
    $region33: #{deconding_block_forward.5} parent=5 // pred_check
      _
    $region34: #{deconding_block_forward.5} parent=5 // pred_check_branch
      %194 = sbr.rel (%p191) target = $region36
    $region35: #{deconding_block_forward.5} parent=5 // pred_region
      %s195 = ssub.s32 %s12, 1
      %p196 = scmp.lt.s32.totalorder %s17, 1
      %s197 = scalar_select %p196, %s17, 1
      %s198 = smul.addr %s197, 3
      %s199 = smul.addr %s198, 8
      %s200 = scalar_lea.vmem %s0, %s199
      %p201 = pneg %p38
      %p202 = pneg %p35
      %p203 = pneg %p59
      %p204 = pneg %p56
      %p205 = pneg %p80
      %p206 = pneg %p77
      %p207 = pneg %p101
      %p208 = pneg %p98
      %p209 = pneg %p127
      %p210 = pneg %p124
      %p211 = scmp.lt.s32.totalorder %s17, 1
      %s212 = scalar_select %p211, %s17, 1
      %s213 = smul.addr %s212, 3
      %s214 = smul.addr %s213, 8
      %s215 = scalar_lea.vmem %s4, %s214
      %p216 = pneg %p153
      %p217 = pneg %p150
      %p218 = scmp.lt.s32.totalorder %s17, 1
      %s219 = scalar_select %p218, %s17, 1
      %s220 = smul.addr %s219, 8
      %s221 = scalar_lea.vmem %s5, %s220
      %p222 = scmp.lt.s32.totalorder %s17, 1
      %s223 = scalar_select %p222, %s17, 1
      %s224 = smul.addr %s223, 3
      %s225 = smul.addr %s224, 8
      %s226 = scalar_lea.vmem %s0, %s225
      %p227 = scmp.lt.s32.totalorder %s17, 1
      %s228 = scalar_select %p227, %s17, 1
      %s229 = smul.addr %s228, 3
      %s230 = smul.addr %s229, 8
      %s231 = scalar_lea.vmem %s4, %s230
      %p232 = scmp.lt.s32.totalorder %s17, 1
      %s233 = scalar_select %p232, %s17, 1
      %s234 = smul.addr %s233, 8
      %s235 = scalar_lea.vmem %s5, %s234
      %v236 = vld [vmem:[%s226] sm:$0xff]
      %v237 = vld [vmem:[%s226 + $0x8] sm:$0xff]
      %v238 = vld [vmem:[%s226 + $0x10] sm:$0xff]
      %242 = vrot.lane.b32.xlu0 %v236, 127
      %v243 = vpop.permute.xlu0 %242
      %244 = vrot.lane.b32.xlu0 %v237, 127
      %v245 = vpop.permute.xlu0 %244
      %246 = vrot.lane.b32.xlu0 %v238, 127
      %v247 = vpop.permute.xlu0 %246
      %vm248 = vcmask 1039360
      %v249 = vsel %vm248, %v243, %v245
      %v250 = vsel %vm248, %v245, %v247
      %254 = vrot.lane.b32.xlu0 %v236, 126
      %v255 = vpop.permute.xlu0 %254
      %256 = vrot.lane.b32.xlu0 %v237, 126
      %v257 = vpop.permute.xlu0 %256
      %258 = vrot.lane.b32.xlu0 %v238, 126
      %v259 = vpop.permute.xlu0 %258
      %vm260 = vcmask 1031168
      %v261 = vsel %vm260, %v255, %v257
      %v262 = vsel %vm260, %v257, %v259
      %266 = vrot.lane.b32.xlu0 %v236, 110
      %v267 = vpop.permute.xlu0 %266
      %268 = vrot.lane.b32.xlu0 %v237, 110
      %v269 = vpop.permute.xlu0 %268
      %270 = vrot.lane.b32.xlu0 %v238, 110
      %v271 = vpop.permute.xlu0 %270
      %vm272 = vcmask 900096
      %v273 = vsel %vm272, %v267, %v269
      %v274 = vsel %vm272, %v269, %v271
      %278 = vrot.lane.b32.xlu0 %v236, 109
      %v279 = vpop.permute.xlu0 %278
      %280 = vrot.lane.b32.xlu0 %v237, 109
      %v281 = vpop.permute.xlu0 %280
      %282 = vrot.lane.b32.xlu0 %v238, 109
      %v283 = vpop.permute.xlu0 %282
      %vm284 = vcmask 891904
      %v285 = vsel %vm284, %v279, %v281
      %v286 = vsel %vm284, %v281, %v283
      %290 = vrot.lane.b32.xlu0 %v236, 108
      %v291 = vpop.permute.xlu0 %290
      %292 = vrot.lane.b32.xlu0 %v237, 108
      %v293 = vpop.permute.xlu0 %292
      %294 = vrot.lane.b32.xlu0 %v238, 108
      %v295 = vpop.permute.xlu0 %294
      %vm296 = vcmask 883712
      %v297 = vsel %vm296, %v291, %v293
      %v298 = vsel %vm296, %v293, %v295
      %302 = vrot.lane.b32.xlu0 %v236, 92
      %v303 = vpop.permute.xlu0 %302
      %304 = vrot.lane.b32.xlu0 %v237, 92
      %v305 = vpop.permute.xlu0 %304
      %306 = vrot.lane.b32.xlu0 %v238, 92
      %v307 = vpop.permute.xlu0 %306
      %vm308 = vcmask 752640
      %v309 = vsel %vm308, %v303, %v305
      %v310 = vsel %vm308, %v305, %v307
      %314 = vrot.lane.b32.xlu0 %v236, 91
      %v315 = vpop.permute.xlu0 %314
      %316 = vrot.lane.b32.xlu0 %v237, 91
      %v317 = vpop.permute.xlu0 %316
      %318 = vrot.lane.b32.xlu0 %v238, 91
      %v319 = vpop.permute.xlu0 %318
      %vm320 = vcmask 744448
      %v321 = vsel %vm320, %v315, %v317
      %v322 = vsel %vm320, %v317, %v319
      %326 = vrot.lane.b32.xlu0 %v236, 90
      %v327 = vpop.permute.xlu0 %326
      %328 = vrot.lane.b32.xlu0 %v237, 90
      %v329 = vpop.permute.xlu0 %328
      %330 = vrot.lane.b32.xlu0 %v238, 90
      %v331 = vpop.permute.xlu0 %330
      %vm332 = vcmask 736256
      %v333 = vsel %vm332, %v327, %v329
      %v334 = vsel %vm332, %v329, %v331
      %v338 = vld [vmem:[%s1] sm:$0xff]
      %v339 = vld [vmem:[%s2] sm:$0xff]
      %341 = vset.pattern.permute.xlu0 0
      %342 = vperm.xlu0 %341, %v339
      %v343 = vpop.permute.xlu0 %342
      %vm345 = vcmask 588800
      %v347 = vsel %vm345, %v338, 0
      %349 = vmatprep.subr.mxu0 %v237
      %350 = vmatpush1.msra.mxu0 %v236
      %351 = vmatprep.subr.mxu0 %v250
      %352 = vmatpush1.msra.mxu0 %v249
      %353 = vmatprep.subr.mxu0 %v262
      %354 = vmatpush1.msra.mxu0 %v261
      %355 = vmatprep.subr.mxu0 %v274
      %356 = vmatpush1.msra.mxu0 %v273
      %357 = vmatprep.subr.mxu0 %v286
      %358 = vmatpush1.msra.mxu0 %v285
      %359 = vmatprep.subr.mxu0 %v298
      %360 = vmatpush1.msra.mxu0 %v297
      %361 = vmatprep.subr.mxu0 %v310
      %362 = vmatpush1.msra.mxu0 %v309
      %363 = vmatprep.subr.mxu0 %v322
      %364 = vmatpush1.msra.mxu0 %v321
      %365 = vmatprep.subr.mxu0 %v334
      %366 = vmatpush1.msra.mxu0 %v333
      %367 = vmatprep.subr.mxu0 0.0
      %368 = vmatpush1.msra.mxu0 0.0
      %369 = vmatprep.subr.mxu0 0.0
      %370 = vmatpush1.msra.mxu0 0.0
      %371 = vmatprep.subr.mxu0 0.0
      %372 = vmatpush1.msra.mxu0 0.0
      %373 = vmatprep.subr.mxu0 0.0
      %374 = vmatpush1.msra.mxu0 0.0
      %375 = vmatprep.subr.mxu0 0.0
      %376 = vmatpush1.msra.mxu0 0.0
      %377 = vmatprep.subr.mxu0 0.0
      %378 = vmatpush1.msra.mxu0 0.0
      %379 = vmatprep.subr.mxu0 0.0
      %380 = vmatpush1.msra.mxu0 0.0
      %381 = vmatprep.subr.mxu0 0.0
      %382 = vmatpush1.msra.mxu0 0.0
      %383 = vmatprep.subr.mxu0 0.0
      %384 = vmatpush1.msra.mxu0 0.0
      %385 = vmatprep.subr.mxu0 0.0
      %386 = vmatpush1.msra.mxu0 0.0
      %387 = vmatprep.subr.mxu0 0.0
      %388 = vmatpush1.msra.mxu0 0.0
      %389 = vmatprep.subr.mxu0 0.0
      %390 = vmatpush1.msra.mxu0 0.0
      %391 = vmatprep.subr.mxu0 0.0
      %392 = vmatpush1.msra.mxu0 0.0
      %393 = vmatprep.subr.mxu0 0.0
      %394 = vmatpush1.msra.mxu0 0.0
      %395 = vmatprep.subr.mxu0 0.0
      %396 = vmatpush1.msra.mxu0 0.0
      %397 = vmatprep.subr.mxu0 0.0
      %398 = vmatpush1.msra.mxu0 0.0
      %399 = vmatprep.subr.mxu0 0.0
      %400 = vmatpush1.msra.mxu0 0.0
      %401 = vmatprep.subr.mxu0 0.0
      %402 = vmatpush1.msra.mxu0 0.0
      %403 = vmatprep.subr.mxu0 0.0
      %404 = vmatpush1.msra.mxu0 0.0
      %405 = vmatprep.subr.mxu0 0.0
      %406 = vmatpush1.msra.mxu0 0.0
      %407 = vmatprep.subr.mxu0 0.0
      %408 = vmatpush1.msra.mxu0 0.0
      %409 = vmatprep.subr.mxu0 0.0
      %410 = vmatpush1.msra.mxu0 0.0
      %411 = vmatprep.subr.mxu0 0.0
      %412 = vmatpush1.msra.mxu0 0.0
      %413 = vmatprep.mubr.f32.mxu0 0.0
      %414 = vmatmul.mubr.f32.gmra.mrb[0].mxu0 %v347
      %v415 = vpop.f32.mrb[0].mxu0
      %v416 = vadd.f32 %v343, %v415
      %v417 = vpop.f32.mrb[0].mxu0
      %v418 = vadd.f32 %v343, %v417
      %419 = vdwg.mxu0
      %420 = vmatprep.subr.mxu0 0.0
      %421 = vmatpush1.msra.mxu0 %v238
      %422 = vmatprep.subr.mxu0 0.0
      %423 = vmatpush1.msra.mxu0 %v247
      %424 = vmatprep.subr.mxu0 0.0
      %425 = vmatpush1.msra.mxu0 %v259
      %426 = vmatprep.subr.mxu0 0.0
      %427 = vmatpush1.msra.mxu0 %v271
      %428 = vmatprep.subr.mxu0 0.0
      %429 = vmatpush1.msra.mxu0 %v283
      %430 = vmatprep.subr.mxu0 0.0
      %431 = vmatpush1.msra.mxu0 %v295
      %432 = vmatprep.subr.mxu0 0.0
      %433 = vmatpush1.msra.mxu0 %v307
      %434 = vmatprep.subr.mxu0 0.0
      %435 = vmatpush1.msra.mxu0 %v319
      %436 = vmatprep.subr.mxu0 0.0
      %437 = vmatpush1.msra.mxu0 %v331
      %438 = vmatprep.subr.mxu0 0.0
      %439 = vmatpush1.msra.mxu0 0.0
      %440 = vmatprep.subr.mxu0 0.0
      %441 = vmatpush1.msra.mxu0 0.0
      %442 = vmatprep.subr.mxu0 0.0
      %443 = vmatpush1.msra.mxu0 0.0
      %444 = vmatprep.subr.mxu0 0.0
      %445 = vmatpush1.msra.mxu0 0.0
      %446 = vmatprep.subr.mxu0 0.0
      %447 = vmatpush1.msra.mxu0 0.0
      %448 = vmatprep.subr.mxu0 0.0
      %449 = vmatpush1.msra.mxu0 0.0
      %450 = vmatprep.subr.mxu0 0.0
      %451 = vmatpush1.msra.mxu0 0.0
      %452 = vmatprep.subr.mxu0 0.0
      %453 = vmatpush1.msra.mxu0 0.0
      %454 = vmatprep.subr.mxu0 0.0
      %455 = vmatpush1.msra.mxu0 0.0
      %456 = vmatprep.subr.mxu0 0.0
      %457 = vmatpush1.msra.mxu0 0.0
      %458 = vmatprep.subr.mxu0 0.0
      %459 = vmatpush1.msra.mxu0 0.0
      %460 = vmatprep.subr.mxu0 0.0
      %461 = vmatpush1.msra.mxu0 0.0
      %462 = vmatprep.subr.mxu0 0.0
      %463 = vmatpush1.msra.mxu0 0.0
      %464 = vmatprep.subr.mxu0 0.0
      %465 = vmatpush1.msra.mxu0 0.0
      %466 = vmatprep.subr.mxu0 0.0
      %467 = vmatpush1.msra.mxu0 0.0
      %468 = vmatprep.subr.mxu0 0.0
      %469 = vmatpush1.msra.mxu0 0.0
      %470 = vmatprep.subr.mxu0 0.0
      %471 = vmatpush1.msra.mxu0 0.0
      %472 = vmatprep.subr.mxu0 0.0
      %473 = vmatpush1.msra.mxu0 0.0
      %474 = vmatprep.subr.mxu0 0.0
      %475 = vmatpush1.msra.mxu0 0.0
      %476 = vmatprep.subr.mxu0 0.0
      %477 = vmatpush1.msra.mxu0 0.0
      %478 = vmatprep.subr.mxu0 0.0
      %479 = vmatpush1.msra.mxu0 0.0
      %480 = vmatprep.subr.mxu0 0.0
      %481 = vmatpush1.msra.mxu0 0.0
      %482 = vmatprep.subr.mxu0 0.0
      %483 = vmatpush1.msra.mxu0 0.0
      %484 = vmatprep.mubr.f32.mxu0 0.0
      %485 = vmatmul.mubr.f32.gmra.mrb[0].mxu0 %v347
      %v486 = vpop.f32.mrb[0].mxu0
      %v487 = vadd.f32 %v343, %v486
      %v488 = vpop.f32.mrb[0].mxu0
      %489 = vdwg.mxu0
      %490 = vst [vmem:[%s231] sm:$0xff] %v416
      %491 = vst [vmem:[%s231 + $0x8] sm:$0xff] %v418
      %vm492 = vcmask 261120
      %493 = vst.msk [vmem:[%s231 + $0x10] sm:$0xff] %vm492, %v487
      %v494 = vld [vmem:[%s3] sm:$0x7]
      %v496 = vlaneseq
      %v497 = vshrl.u32 %v496, 7
      %v498 = vsub.s32 0, %v497
      %v499 = vrot.slane %v494, %v498
      %v500 = vlaneseq
      %v501 = vshrl.u32 %v500, 7
      %v502 = vsub.s32 1, %v501
      %v503 = vrot.slane %v494, %v502
      %v504 = vlaneseq
      %v505 = vshrl.u32 %v504, 7
      %v506 = vsub.s32 2, %v505
      %v507 = vrot.slane %v494, %v506
      %v511 = vmul.f32 %v416, %v499
      %v512 = vmul.f32 %v418, %v503
      %v513 = vmul.f32 %v487, %v507
      %v514 = vadd.f32 %v511, %v512
      %v515 = vsel %vm492, %v513, 0.0
      %v516 = vadd.f32 %v514, %v515
      %517 = vadd.xlane.f32.xlu0 %v516
      %v518 = vpop.xlane.xlu0 %517
      %v519 = vmul.f32 %v511, %v511
      %v520 = vmul.f32 %v512, %v512
      %v521 = vmul.f32 %v513, %v513
      %v522 = vadd.f32 %v519, %v520
      %v523 = vsel %vm492, %v521, 0.0
      %v524 = vadd.f32 %v522, %v523
      %525 = vadd.xlane.f32.xlu0 %v524
      %v526 = vpop.xlane.xlu0 %525
      %vm527 = vcmask 7168
      %v528 = vsel %vm527, %v518, %v526
      %vm529 = vcmask 15360
      %530 = vst.msk [vmem:[%s235] sm:$0xff] %vm529, %v528
      %p531 = scmp.lt.s32.totalorder %s17, 1
      %s532 = scalar_select %p531, %s17, 1
      %s533 = smul.addr %s532, 3
      %s534 = smul.addr %s533, 8
      %s535 = scalar_lea.vmem %s4, %s534
      %p536 = scmp.lt.s32.totalorder %s17, 1
      %s537 = scalar_select %p536, %s17, 1
      %s538 = smul.addr %s537, 8
      %s539 = scalar_lea.vmem %s5, %s538
      // Predicated region
      $region37: #{deconding_block_forward.5} parent=35 // pred_check
        %p540 = pneg %p124
      $region38: #{deconding_block_forward.5} parent=35 // pred_check_branch
        %542 = sbr.rel (%p540) target = $region40
      $region39: #{deconding_block_forward.5} parent=35 // pred_region
        _
      $region40: #{deconding_block_forward.5} parent=35 // pred_fallthru
        _
      // Predicated region
      $region41: #{deconding_block_forward.5} parent=35 // pred_check
        %p543 = pneg %p150
      $region42: #{deconding_block_forward.5} parent=35 // pred_check_branch
        %545 = sbr.rel (%p543) target = $region44
      $region43: #{deconding_block_forward.5} parent=35 // pred_region
        _
      $region44: #{deconding_block_forward.5} parent=35 // pred_fallthru
        _
    $region36: #{deconding_block_forward.5} parent=5 // pred_fallthru
      _
    %p546 = scmp.le.s32.totalorder 2, %s12
    // Predicated region
    $region45: #{deconding_block_forward.5} parent=5 // pred_check
      %p547 = pneg %p546
    $region46: #{deconding_block_forward.5} parent=5 // pred_check_branch
      %549 = sbr.rel (%p547) target = $region48
    $region47: #{deconding_block_forward.5} parent=5 // pred_region
      %s550 = ssub.s32 %s12, 2
      // Predicated region
      $region49: #{deconding_block_forward.5} parent=47 // pred_check
        %p551 = pneg %p130
      $region50: #{deconding_block_forward.5} parent=47 // pred_check_branch
        %553 = sbr.rel (%p551) target = $region52
      $region51: #{deconding_block_forward.5} parent=47 // pred_region
        %p554 = scmp.lt.s32.totalorder %s18, 1
        %s555 = scalar_select %p554, %s18, 1
        %s556 = smul.addr %s555, 3
        %s557 = smul.addr %s556, 8
        %s558 = scalar_lea.vmem %s4, %s557
      $region52: #{deconding_block_forward.5} parent=47 // pred_fallthru
        _
      // Predicated region
      $region53: #{deconding_block_forward.5} parent=47 // pred_check
        %p559 = pneg %p156
      $region54: #{deconding_block_forward.5} parent=47 // pred_check_branch
        %561 = sbr.rel (%p559) target = $region56
      $region55: #{deconding_block_forward.5} parent=47 // pred_region
        %p562 = scmp.lt.s32.totalorder %s18, 1
        %s563 = scalar_select %p562, %s18, 1
        %s564 = smul.addr %s563, 8
        %s565 = scalar_lea.vmem %s5, %s564
      $region56: #{deconding_block_forward.5} parent=47 // pred_fallthru
        _
    $region48: #{deconding_block_forward.5} parent=5 // pred_fallthru
      _
  $region6: #{deconding_block_forward.5} parent=0 // loop_footer
    %s16 = sadd.s32 1, %s12
  $region7: #{deconding_block_forward.5} parent=0 // loop_footer_branch
    %11 = sbr.rel target = $region3
  $region8: #{deconding_block_forward.5} parent=0 // loop_exit
    _

// kernel: deconding_block_forward.6
$region0: #{deconding_block_forward.6}
  #allocation0 [shape = 'u32[]', space=smem, size = 0x4, offset = 0x4, fixed_abs, tag = 'smem constant byte address 0x4 - core index']
  #allocation1 [shape = 'u32[144,128]{1,0:T(1,128)}', space=vmem, size = 0x12000, scoped, tag = 'internal scratch']
  %s0 = inlined_call_operand.vmem [shape: f32[2,8,288], index: 0, kind: input, shape index: {}]
  %s1 = inlined_call_operand.vmem [shape: f32[1,288], index: 1, kind: input, shape index: {}]
  %s2 = inlined_call_operand.vmem [shape: f32[8,1], index: 2, kind: input, shape index: {}]
  %s3 = inlined_call_operand.vmem [shape: f32[8,1], index: 3, kind: input, shape index: {}]
  %s4 = inlined_call_operand.vmem [shape: f32[8,8], index: 4, kind: input, shape index: {}]
  %s5 = inlined_call_operand.vmem [shape: f32[8,1], index: 5, kind: input, shape index: {}]
  %s6 = inlined_call_operand.vmem [shape: f32[2,8,288], index: 6, kind: output, shape index: {0}]
  %s7 = inlined_call_operand.vmem [shape: f32[2,8,2], index: 7, kind: output, shape index: {1}]
  %8 = xla_tuple %s6, %s7
  %s9 = sld [smem:[#allocation0]]
  $region65: #{deconding_block_forward.6} parent=0
    _
  %s11 = ssub.s32 1, %s9
  %s12 = scalar_select 0, %s11, %s9
  loop: start=0, step=1, limit=4
  $region2: #{deconding_block_forward.6} parent=0 // loop_pre_header
    _
  $region3: #{deconding_block_forward.6} parent=0 // loop_header
    %s14 = sphi 0, %s18
    %p15 = scmp.ge.s32.totalorder %s14, 4
    %s24 = sphi 0, %s26
    %s27 = sphi 0, %s24
    %s28 = sphi 0, %s27
    %s44 = sphi 0, %s28
    %s48 = sphi 0, %s48
    %s50 = sphi 0, %s48
    %s51 = sphi 0, %s50
    %s65 = sphi 0, %s51
    %s69 = sphi 0, %s69
    %s71 = sphi 0, %s69
    %s72 = sphi 0, %s71
    %s86 = sphi 0, %s72
    %s90 = sphi 0, %s90
    %s92 = sphi 0, %s90
    %s93 = sphi 0, %s92
    %s107 = sphi 0, %s93
    %s111 = sphi 0, %s111
    %s113 = sphi 0, %s111
    %s114 = sphi 0, %s113
    %s128 = sphi 0, %s114
    %s132 = sphi 0, %s132
    %s134 = sphi 0, %s132
    %s135 = sphi 0, %s134
    %s149 = sphi 0, %s135
    %s155 = sphi 0, %s157
    %s158 = sphi 0, %s155
    %s159 = sphi 0, %s158
    %s175 = sphi 0, %s159
    %s181 = sphi 0, %s183
    %s184 = sphi 0, %s181
    %s185 = sphi 0, %s184
    %s201 = sphi 0, %s185
  $region4: #{deconding_block_forward.6} parent=0 // loop_header_branch
    %17 = sbr.rel (%p15) target = $region8
  $region5: #{deconding_block_forward.6} parent=0 // loop_body
    %s19 = ssub.s32 %s14, 1
    %s20 = ssub.s32 %s14, 2
    %s21 = sadd.s32 %s14, 1
    %s22 = ssub.s32 %s14, %s21
    %p23 = scmp.eq.s32.totalorder %s22, 0
    %s25 = sadd.s32 %s24, 1
    %s26 = scalar_select %p23, %s24, %s25
    %p29 = pneg %p23
    %p30 = scmp.eq.s32.totalorder %s14, 1
    %p31 = por %p29, %p30
    %p32 = scmp.ne.s32.totalorder %s24, %s27
    %p33 = scmp.eq.s32.totalorder %s14, 0
    %p34 = por %p32, %p33
    %p35 = scmp.ne.s32.totalorder %s24, %s27
    %p36 = scmp.eq.s32.totalorder %s19, 1
    %p37 = por %p35, %p36
    %p38 = scmp.ne.s32.totalorder %s27, %s28
    %p39 = scmp.eq.s32.totalorder %s19, 0
    %p40 = por %p38, %p39
    %p41 = scmp.ne.s32.totalorder %s27, %s28
    %p42 = scmp.eq.s32.totalorder %s20, 1
    %p43 = por %p41, %p42
    %p45 = scmp.ne.s32.totalorder %s28, %s44
    %p46 = scmp.eq.s32.totalorder %s20, 0
    %p47 = por %p45, %p46
    %s49 = sadd.s32 %s48, 1
    %p52 = scmp.eq.s32.totalorder %s14, 1
    %p53 = scmp.ne.s32.totalorder %s48, %s50
    %p54 = scmp.eq.s32.totalorder %s14, 0
    %p55 = por %p53, %p54
    %p56 = scmp.ne.s32.totalorder %s48, %s50
    %p57 = scmp.eq.s32.totalorder %s19, 1
    %p58 = por %p56, %p57
    %p59 = scmp.ne.s32.totalorder %s50, %s51
    %p60 = scmp.eq.s32.totalorder %s19, 0
    %p61 = por %p59, %p60
    %p62 = scmp.ne.s32.totalorder %s50, %s51
    %p63 = scmp.eq.s32.totalorder %s20, 1
    %p64 = por %p62, %p63
    %p66 = scmp.ne.s32.totalorder %s51, %s65
    %p67 = scmp.eq.s32.totalorder %s20, 0
    %p68 = por %p66, %p67
    %s70 = sadd.s32 %s69, 1
    %p73 = scmp.eq.s32.totalorder %s14, 1
    %p74 = scmp.ne.s32.totalorder %s69, %s71
    %p75 = scmp.eq.s32.totalorder %s14, 0
    %p76 = por %p74, %p75
    %p77 = scmp.ne.s32.totalorder %s69, %s71
    %p78 = scmp.eq.s32.totalorder %s19, 1
    %p79 = por %p77, %p78
    %p80 = scmp.ne.s32.totalorder %s71, %s72
    %p81 = scmp.eq.s32.totalorder %s19, 0
    %p82 = por %p80, %p81
    %p83 = scmp.ne.s32.totalorder %s71, %s72
    %p84 = scmp.eq.s32.totalorder %s20, 1
    %p85 = por %p83, %p84
    %p87 = scmp.ne.s32.totalorder %s72, %s86
    %p88 = scmp.eq.s32.totalorder %s20, 0
    %p89 = por %p87, %p88
    %s91 = sadd.s32 %s90, 1
    %p94 = scmp.eq.s32.totalorder %s14, 1
    %p95 = scmp.ne.s32.totalorder %s90, %s92
    %p96 = scmp.eq.s32.totalorder %s14, 0
    %p97 = por %p95, %p96
    %p98 = scmp.ne.s32.totalorder %s90, %s92
    %p99 = scmp.eq.s32.totalorder %s19, 1
    %p100 = por %p98, %p99
    %p101 = scmp.ne.s32.totalorder %s92, %s93
    %p102 = scmp.eq.s32.totalorder %s19, 0
    %p103 = por %p101, %p102
    %p104 = scmp.ne.s32.totalorder %s92, %s93
    %p105 = scmp.eq.s32.totalorder %s20, 1
    %p106 = por %p104, %p105
    %p108 = scmp.ne.s32.totalorder %s93, %s107
    %p109 = scmp.eq.s32.totalorder %s20, 0
    %p110 = por %p108, %p109
    %s112 = sadd.s32 %s111, 1
    %p115 = scmp.eq.s32.totalorder %s14, 1
    %p116 = scmp.ne.s32.totalorder %s111, %s113
    %p117 = scmp.eq.s32.totalorder %s14, 0
    %p118 = por %p116, %p117
    %p119 = scmp.ne.s32.totalorder %s111, %s113
    %p120 = scmp.eq.s32.totalorder %s19, 1
    %p121 = por %p119, %p120
    %p122 = scmp.ne.s32.totalorder %s113, %s114
    %p123 = scmp.eq.s32.totalorder %s19, 0
    %p124 = por %p122, %p123
    %p125 = scmp.ne.s32.totalorder %s113, %s114
    %p126 = scmp.eq.s32.totalorder %s20, 1
    %p127 = por %p125, %p126
    %p129 = scmp.ne.s32.totalorder %s114, %s128
    %p130 = scmp.eq.s32.totalorder %s20, 0
    %p131 = por %p129, %p130
    %s133 = sadd.s32 %s132, 1
    %p136 = scmp.eq.s32.totalorder %s14, 1
    %p137 = scmp.ne.s32.totalorder %s132, %s134
    %p138 = scmp.eq.s32.totalorder %s14, 0
    %p139 = por %p137, %p138
    %p140 = scmp.ne.s32.totalorder %s132, %s134
    %p141 = scmp.eq.s32.totalorder %s19, 1
    %p142 = por %p140, %p141
    %p143 = scmp.ne.s32.totalorder %s134, %s135
    %p144 = scmp.eq.s32.totalorder %s19, 0
    %p145 = por %p143, %p144
    %p146 = scmp.ne.s32.totalorder %s134, %s135
    %p147 = scmp.eq.s32.totalorder %s20, 1
    %p148 = por %p146, %p147
    %p150 = scmp.ne.s32.totalorder %s135, %s149
    %p151 = scmp.eq.s32.totalorder %s20, 0
    %p152 = por %p150, %p151
    %s153 = ssub.s32 %s14, %s21
    %p154 = scmp.eq.s32.totalorder %s153, 0
    %s156 = sadd.s32 %s155, 1
    %s157 = scalar_select %p154, %s155, %s156
    %p160 = pneg %p154
    %p161 = scmp.eq.s32.totalorder %s14, 1
    %p162 = por %p160, %p161
    %p163 = scmp.ne.s32.totalorder %s155, %s158
    %p164 = scmp.eq.s32.totalorder %s14, 0
    %p165 = por %p163, %p164
    %p166 = scmp.ne.s32.totalorder %s155, %s158
    %p167 = scmp.eq.s32.totalorder %s19, 1
    %p168 = por %p166, %p167
    %p169 = scmp.ne.s32.totalorder %s158, %s159
    %p170 = scmp.eq.s32.totalorder %s19, 0
    %p171 = por %p169, %p170
    %p172 = scmp.ne.s32.totalorder %s158, %s159
    %p173 = scmp.eq.s32.totalorder %s20, 1
    %p174 = por %p172, %p173
    %p176 = scmp.ne.s32.totalorder %s159, %s175
    %p177 = scmp.eq.s32.totalorder %s20, 0
    %p178 = por %p176, %p177
    %s179 = ssub.s32 %s14, %s21
    %p180 = scmp.eq.s32.totalorder %s179, 0
    %s182 = sadd.s32 %s181, 1
    %s183 = scalar_select %p180, %s181, %s182
    %p186 = pneg %p180
    %p187 = scmp.eq.s32.totalorder %s14, 1
    %p188 = por %p186, %p187
    %p189 = scmp.ne.s32.totalorder %s181, %s184
    %p190 = scmp.eq.s32.totalorder %s14, 0
    %p191 = por %p189, %p190
    %p192 = scmp.ne.s32.totalorder %s181, %s184
    %p193 = scmp.eq.s32.totalorder %s19, 1
    %p194 = por %p192, %p193
    %p195 = scmp.ne.s32.totalorder %s184, %s185
    %p196 = scmp.eq.s32.totalorder %s19, 0
    %p197 = por %p195, %p196
    %p198 = scmp.ne.s32.totalorder %s184, %s185
    %p199 = scmp.eq.s32.totalorder %s20, 1
    %p200 = por %p198, %p199
    %p202 = scmp.ne.s32.totalorder %s185, %s201
    %p203 = scmp.eq.s32.totalorder %s20, 0
    %p204 = por %p202, %p203
    %p205 = scmp.le.s32.totalorder 1, %s14
    %p206 = scmp.lt.s32.totalorder %s14, 3
    %p207 = pnand %p205, %p206
    %p208 = pneg %p207
    // Predicated region
    $region9: #{deconding_block_forward.6} parent=5 // pred_check
      _
    $region10: #{deconding_block_forward.6} parent=5 // pred_check_branch
      %210 = sbr.rel (%p207) target = $region12
    $region11: #{deconding_block_forward.6} parent=5 // pred_region
      %s211 = ssub.s32 %s14, 1
      // Predicated region
      $region13: #{deconding_block_forward.6} parent=11 // pred_check
        %p212 = pneg %p61
      $region14: #{deconding_block_forward.6} parent=11 // pred_check_branch
        %214 = sbr.rel (%p212) target = $region16
      $region15: #{deconding_block_forward.6} parent=11 // pred_region
        _
      $region16: #{deconding_block_forward.6} parent=11 // pred_fallthru
        _
      // Predicated region
      $region17: #{deconding_block_forward.6} parent=11 // pred_check
        %p215 = pneg %p82
      $region18: #{deconding_block_forward.6} parent=11 // pred_check_branch
        %217 = sbr.rel (%p215) target = $region20
      $region19: #{deconding_block_forward.6} parent=11 // pred_region
        _
      $region20: #{deconding_block_forward.6} parent=11 // pred_fallthru
        _
      // Predicated region
      $region21: #{deconding_block_forward.6} parent=11 // pred_check
        %p218 = pneg %p103
      $region22: #{deconding_block_forward.6} parent=11 // pred_check_branch
        %220 = sbr.rel (%p218) target = $region24
      $region23: #{deconding_block_forward.6} parent=11 // pred_region
        _
      $region24: #{deconding_block_forward.6} parent=11 // pred_fallthru
        _
      // Predicated region
      $region25: #{deconding_block_forward.6} parent=11 // pred_check
        %p221 = pneg %p124
      $region26: #{deconding_block_forward.6} parent=11 // pred_check_branch
        %223 = sbr.rel (%p221) target = $region28
      $region27: #{deconding_block_forward.6} parent=11 // pred_region
        _
      $region28: #{deconding_block_forward.6} parent=11 // pred_fallthru
        _
      // Predicated region
      $region29: #{deconding_block_forward.6} parent=11 // pred_check
        %p224 = pneg %p145
      $region30: #{deconding_block_forward.6} parent=11 // pred_check_branch
        %226 = sbr.rel (%p224) target = $region32
      $region31: #{deconding_block_forward.6} parent=11 // pred_region
        _
      $region32: #{deconding_block_forward.6} parent=11 // pred_fallthru
        _
    $region12: #{deconding_block_forward.6} parent=5 // pred_fallthru
      _
    %p227 = scmp.lt.s32.totalorder %s14, 2
    // Predicated region
    $region33: #{deconding_block_forward.6} parent=5 // pred_check
      %p228 = pneg %p227
    $region34: #{deconding_block_forward.6} parent=5 // pred_check_branch
      %230 = sbr.rel (%p228) target = $region36
    $region35: #{deconding_block_forward.6} parent=5 // pred_region
      // Predicated region
      $region37: #{deconding_block_forward.6} parent=35 // pred_check
        %p231 = pneg %p34
      $region38: #{deconding_block_forward.6} parent=35 // pred_check_branch
        %233 = sbr.rel (%p231) target = $region40
      $region39: #{deconding_block_forward.6} parent=35 // pred_region
        %p234 = scmp.lt.s32.totalorder %s14, 1
        %s235 = scalar_select %p234, %s14, 1
        %s236 = smul.addr %s235, 3
        %s237 = smul.addr %s236, 8
        %s238 = scalar_lea.vmem %s0, %s237
      $region40: #{deconding_block_forward.6} parent=35 // pred_fallthru
        _
    $region36: #{deconding_block_forward.6} parent=5 // pred_fallthru
      _
    %p239 = scmp.le.s32.totalorder 1, %s14
    %p240 = scmp.lt.s32.totalorder %s14, 3
    %p241 = pnand %p239, %p240
    %p242 = pneg %p241
    // Predicated region
    $region41: #{deconding_block_forward.6} parent=5 // pred_check
      _
    $region42: #{deconding_block_forward.6} parent=5 // pred_check_branch
      %244 = sbr.rel (%p241) target = $region44
    $region43: #{deconding_block_forward.6} parent=5 // pred_region
      %s245 = ssub.s32 %s14, 1
      %p246 = scmp.lt.s32.totalorder %s19, 1
      %s247 = scalar_select %p246, %s19, 1
      %s248 = smul.addr %s247, 3
      %s249 = smul.addr %s248, 8
      %s250 = scalar_lea.vmem %s0, %s249
      %p251 = pneg %p40
      %p252 = pneg %p37
      %p253 = pneg %p61
      %p254 = pneg %p58
      %p255 = pneg %p82
      %p256 = pneg %p79
      %p257 = pneg %p103
      %p258 = pneg %p100
      %p259 = pneg %p124
      %p260 = pneg %p121
      %p261 = pneg %p145
      %p262 = pneg %p142
      %p263 = pneg %p171
      %p264 = pneg %p168
      %p265 = scmp.lt.s32.totalorder %s19, 1
      %s266 = scalar_select %p265, %s19, 1
      %s267 = smul.addr %s266, 3
      %s268 = smul.addr %s267, 8
      %s269 = scalar_lea.vmem %s6, %s268
      %p270 = pneg %p197
      %p271 = pneg %p194
      %p272 = scmp.lt.s32.totalorder %s19, 1
      %s273 = scalar_select %p272, %s19, 1
      %s274 = smul.addr %s273, 8
      %s275 = scalar_lea.vmem %s7, %s274
      %p276 = scmp.lt.s32.totalorder %s19, 1
      %s277 = scalar_select %p276, %s19, 1
      %s278 = smul.addr %s277, 3
      %s279 = smul.addr %s278, 8
      %s280 = scalar_lea.vmem %s0, %s279
      %p281 = scmp.lt.s32.totalorder %s19, 1
      %s282 = scalar_select %p281, %s19, 1
      %s283 = smul.addr %s282, 3
      %s284 = smul.addr %s283, 8
      %s285 = scalar_lea.vmem %s6, %s284
      %p286 = scmp.lt.s32.totalorder %s19, 1
      %s287 = scalar_select %p286, %s19, 1
      %s288 = smul.addr %s287, 8
      %s289 = scalar_lea.vmem %s7, %s288
      %v290 = vld [vmem:[%s2] sm:$0xff]
      %v291 = vld [vmem:[%s280] sm:$0xff]
      %v292 = vld [vmem:[%s280 + $0x8] sm:$0xff]
      %v293 = vld [vmem:[%s280 + $0x10] sm:$0xff]
      %295 = vset.pattern.permute.xlu0 0
      %296 = vperm.xlu0 %295, %v290
      %v297 = vpop.permute.xlu0 %296
      %v299 = vmul.f32 %v297, %v291
      %v300 = vmul.f32 %v297, %v292
      %v301 = vmul.f32 %v297, %v293
      %v302 = vld [vmem:[%s3] sm:$0xff]
      %304 = vset.pattern.permute.xlu0 0
      %305 = vperm.xlu0 %304, %v302
      %v306 = vpop.permute.xlu0 %305
      %v308 = vadd.f32 %v299, %v306
      %v309 = vadd.f32 %v300, %v306
      %v310 = vadd.f32 %v301, %v306
      %v311 = vmul.f32 %v308, 0.01
      %v312 = vmul.f32 %v309, 0.01
      %v313 = vmul.f32 %v310, 0.01
      %v314 = vmax.f32 %v308, %v311
      %v315 = vmax.f32 %v309, %v312
      %v316 = vmax.f32 %v310, %v313
      %v317 = vld [vmem:[%s4] sm:$0xff]
      %v318 = vld [vmem:[%s5] sm:$0xff]
      %320 = vset.pattern.permute.xlu0 0
      %321 = vperm.xlu0 %320, %v318
      %v322 = vpop.permute.xlu0 %321
      %vm324 = vcmask 64512
      %v326 = vsel %vm324, %v317, 0
      %328 = vmatprep.subr.mxu0 %v315
      %329 = vmatpush1.msra.mxu0 %v314
      %330 = vmatprep.subr.mxu0 0.0
      %331 = vmatpush1.msra.mxu0 0.0
      %332 = vmatprep.subr.mxu0 0.0
      %333 = vmatpush1.msra.mxu0 0.0
      %334 = vmatprep.subr.mxu0 0.0
      %335 = vmatpush1.msra.mxu0 0.0
      %336 = vmatprep.subr.mxu0 0.0
      %337 = vmatpush1.msra.mxu0 0.0
      %338 = vmatprep.subr.mxu0 0.0
      %339 = vmatpush1.msra.mxu0 0.0
      %340 = vmatprep.subr.mxu0 0.0
      %341 = vmatpush1.msra.mxu0 0.0
      %342 = vmatprep.subr.mxu0 0.0
      %343 = vmatpush1.msra.mxu0 0.0
      %344 = vmatprep.subr.mxu0 0.0
      %345 = vmatpush1.msra.mxu0 0.0
      %346 = vmatprep.subr.mxu0 0.0
      %347 = vmatpush1.msra.mxu0 0.0
      %348 = vmatprep.subr.mxu0 0.0
      %349 = vmatpush1.msra.mxu0 0.0
      %350 = vmatprep.subr.mxu0 0.0
      %351 = vmatpush1.msra.mxu0 0.0
      %352 = vmatprep.subr.mxu0 0.0
      %353 = vmatpush1.msra.mxu0 0.0
      %354 = vmatprep.subr.mxu0 0.0
      %355 = vmatpush1.msra.mxu0 0.0
      %356 = vmatprep.subr.mxu0 0.0
      %357 = vmatpush1.msra.mxu0 0.0
      %358 = vmatprep.subr.mxu0 0.0
      %359 = vmatpush1.msra.mxu0 0.0
      %360 = vmatprep.subr.mxu0 0.0
      %361 = vmatpush1.msra.mxu0 0.0
      %362 = vmatprep.subr.mxu0 0.0
      %363 = vmatpush1.msra.mxu0 0.0
      %364 = vmatprep.subr.mxu0 0.0
      %365 = vmatpush1.msra.mxu0 0.0
      %366 = vmatprep.subr.mxu0 0.0
      %367 = vmatpush1.msra.mxu0 0.0
      %368 = vmatprep.subr.mxu0 0.0
      %369 = vmatpush1.msra.mxu0 0.0
      %370 = vmatprep.subr.mxu0 0.0
      %371 = vmatpush1.msra.mxu0 0.0
      %372 = vmatprep.subr.mxu0 0.0
      %373 = vmatpush1.msra.mxu0 0.0
      %374 = vmatprep.subr.mxu0 0.0
      %375 = vmatpush1.msra.mxu0 0.0
      %376 = vmatprep.subr.mxu0 0.0
      %377 = vmatpush1.msra.mxu0 0.0
      %378 = vmatprep.subr.mxu0 0.0
      %379 = vmatpush1.msra.mxu0 0.0
      %380 = vmatprep.subr.mxu0 0.0
      %381 = vmatpush1.msra.mxu0 0.0
      %382 = vmatprep.subr.mxu0 0.0
      %383 = vmatpush1.msra.mxu0 0.0
      %384 = vmatprep.subr.mxu0 0.0
      %385 = vmatpush1.msra.mxu0 0.0
      %386 = vmatprep.subr.mxu0 0.0
      %387 = vmatpush1.msra.mxu0 0.0
      %388 = vmatprep.subr.mxu0 0.0
      %389 = vmatpush1.msra.mxu0 0.0
      %390 = vmatprep.subr.mxu0 0.0
      %391 = vmatpush1.msra.mxu0 0.0
      %392 = vmatprep.mubr.f32.mxu0 0.0
      %393 = vmatmul.mubr.f32.gmra.mrb[0].mxu0 %v326
      %v394 = vpop.f32.mrb[0].mxu0
      %v395 = vadd.f32 %v322, %v394
      %v396 = vpop.f32.mrb[0].mxu0
      %v397 = vadd.f32 %v322, %v396
      %398 = vdwg.mxu0
      %399 = vmatprep.subr.mxu0 0.0
      %400 = vmatpush1.msra.mxu0 %v316
      %401 = vmatprep.subr.mxu0 0.0
      %402 = vmatpush1.msra.mxu0 0.0
      %403 = vmatprep.subr.mxu0 0.0
      %404 = vmatpush1.msra.mxu0 0.0
      %405 = vmatprep.subr.mxu0 0.0
      %406 = vmatpush1.msra.mxu0 0.0
      %407 = vmatprep.subr.mxu0 0.0
      %408 = vmatpush1.msra.mxu0 0.0
      %409 = vmatprep.subr.mxu0 0.0
      %410 = vmatpush1.msra.mxu0 0.0
      %411 = vmatprep.subr.mxu0 0.0
      %412 = vmatpush1.msra.mxu0 0.0
      %413 = vmatprep.subr.mxu0 0.0
      %414 = vmatpush1.msra.mxu0 0.0
      %415 = vmatprep.subr.mxu0 0.0
      %416 = vmatpush1.msra.mxu0 0.0
      %417 = vmatprep.subr.mxu0 0.0
      %418 = vmatpush1.msra.mxu0 0.0
      %419 = vmatprep.subr.mxu0 0.0
      %420 = vmatpush1.msra.mxu0 0.0
      %421 = vmatprep.subr.mxu0 0.0
      %422 = vmatpush1.msra.mxu0 0.0
      %423 = vmatprep.subr.mxu0 0.0
      %424 = vmatpush1.msra.mxu0 0.0
      %425 = vmatprep.subr.mxu0 0.0
      %426 = vmatpush1.msra.mxu0 0.0
      %427 = vmatprep.subr.mxu0 0.0
      %428 = vmatpush1.msra.mxu0 0.0
      %429 = vmatprep.subr.mxu0 0.0
      %430 = vmatpush1.msra.mxu0 0.0
      %431 = vmatprep.subr.mxu0 0.0
      %432 = vmatpush1.msra.mxu0 0.0
      %433 = vmatprep.subr.mxu0 0.0
      %434 = vmatpush1.msra.mxu0 0.0
      %435 = vmatprep.subr.mxu0 0.0
      %436 = vmatpush1.msra.mxu0 0.0
      %437 = vmatprep.subr.mxu0 0.0
      %438 = vmatpush1.msra.mxu0 0.0
      %439 = vmatprep.subr.mxu0 0.0
      %440 = vmatpush1.msra.mxu0 0.0
      %441 = vmatprep.subr.mxu0 0.0
      %442 = vmatpush1.msra.mxu0 0.0
      %443 = vmatprep.subr.mxu0 0.0
      %444 = vmatpush1.msra.mxu0 0.0
      %445 = vmatprep.subr.mxu0 0.0
      %446 = vmatpush1.msra.mxu0 0.0
      %447 = vmatprep.subr.mxu0 0.0
      %448 = vmatpush1.msra.mxu0 0.0
      %449 = vmatprep.subr.mxu0 0.0
      %450 = vmatpush1.msra.mxu0 0.0
      %451 = vmatprep.subr.mxu0 0.0
      %452 = vmatpush1.msra.mxu0 0.0
      %453 = vmatprep.subr.mxu0 0.0
      %454 = vmatpush1.msra.mxu0 0.0
      %455 = vmatprep.subr.mxu0 0.0
      %456 = vmatpush1.msra.mxu0 0.0
      %457 = vmatprep.subr.mxu0 0.0
      %458 = vmatpush1.msra.mxu0 0.0
      %459 = vmatprep.subr.mxu0 0.0
      %460 = vmatpush1.msra.mxu0 0.0
      %461 = vmatprep.subr.mxu0 0.0
      %462 = vmatpush1.msra.mxu0 0.0
      %463 = vmatprep.mubr.f32.mxu0 0.0
      %464 = vmatmul.mubr.f32.gmra.mrb[0].mxu0 %v326
      %v465 = vpop.f32.mrb[0].mxu0
      %v466 = vadd.f32 %v322, %v465
      %v467 = vpop.f32.mrb[0].mxu0
      %468 = vdwg.mxu0
      %469 = vst [vmem:[%s285] sm:$0xff] %v395
      %470 = vst [vmem:[%s285 + $0x8] sm:$0xff] %v397
      %vm471 = vcmask 261120
      %472 = vst.msk [vmem:[%s285 + $0x10] sm:$0xff] %vm471, %v466
      %v473 = vld [vmem:[%s1] sm:$0x7]
      %v475 = vlaneseq
      %v476 = vshrl.u32 %v475, 7
      %v477 = vsub.s32 0, %v476
      %v478 = vrot.slane %v473, %v477
      %v479 = vlaneseq
      %v480 = vshrl.u32 %v479, 7
      %v481 = vsub.s32 1, %v480
      %v482 = vrot.slane %v473, %v481
      %v483 = vlaneseq
      %v484 = vshrl.u32 %v483, 7
      %v485 = vsub.s32 2, %v484
      %v486 = vrot.slane %v473, %v485
      %v490 = vmul.f32 %v395, %v478
      %v491 = vmul.f32 %v397, %v482
      %v492 = vmul.f32 %v466, %v486
      %v493 = vadd.f32 %v490, %v491
      %v494 = vsel %vm471, %v492, 0.0
      %v495 = vadd.f32 %v493, %v494
      %496 = vadd.xlane.f32.xlu0 %v495
      %v497 = vpop.xlane.xlu0 %496
      %v498 = vmul.f32 %v490, %v490
      %v499 = vmul.f32 %v491, %v491
      %v500 = vmul.f32 %v492, %v492
      %v501 = vadd.f32 %v498, %v499
      %v502 = vsel %vm471, %v500, 0.0
      %v503 = vadd.f32 %v501, %v502
      %504 = vadd.xlane.f32.xlu0 %v503
      %v505 = vpop.xlane.xlu0 %504
      %vm506 = vcmask 7168
      %v507 = vsel %vm506, %v497, %v505
      %vm508 = vcmask 15360
      %509 = vst.msk [vmem:[%s289] sm:$0xff] %vm508, %v507
      %p510 = scmp.lt.s32.totalorder %s19, 1
      %s511 = scalar_select %p510, %s19, 1
      %s512 = smul.addr %s511, 3
      %s513 = smul.addr %s512, 8
      %s514 = scalar_lea.vmem %s6, %s513
      %p515 = scmp.lt.s32.totalorder %s19, 1
      %s516 = scalar_select %p515, %s19, 1
      %s517 = smul.addr %s516, 8
      %s518 = scalar_lea.vmem %s7, %s517
      // Predicated region
      $region45: #{deconding_block_forward.6} parent=43 // pred_check
        %p519 = pneg %p168
      $region46: #{deconding_block_forward.6} parent=43 // pred_check_branch
        %521 = sbr.rel (%p519) target = $region48
      $region47: #{deconding_block_forward.6} parent=43 // pred_region
        _
      $region48: #{deconding_block_forward.6} parent=43 // pred_fallthru
        _
      // Predicated region
      $region49: #{deconding_block_forward.6} parent=43 // pred_check
        %p522 = pneg %p194
      $region50: #{deconding_block_forward.6} parent=43 // pred_check_branch
        %524 = sbr.rel (%p522) target = $region52
      $region51: #{deconding_block_forward.6} parent=43 // pred_region
        _
      $region52: #{deconding_block_forward.6} parent=43 // pred_fallthru
        _
    $region44: #{deconding_block_forward.6} parent=5 // pred_fallthru
      _
    %p525 = scmp.le.s32.totalorder 2, %s14
    // Predicated region
    $region53: #{deconding_block_forward.6} parent=5 // pred_check
      %p526 = pneg %p525
    $region54: #{deconding_block_forward.6} parent=5 // pred_check_branch
      %528 = sbr.rel (%p526) target = $region56
    $region55: #{deconding_block_forward.6} parent=5 // pred_region
      %s529 = ssub.s32 %s14, 2
      // Predicated region
      $region57: #{deconding_block_forward.6} parent=55 // pred_check
        %p530 = pneg %p174
      $region58: #{deconding_block_forward.6} parent=55 // pred_check_branch
        %532 = sbr.rel (%p530) target = $region60
      $region59: #{deconding_block_forward.6} parent=55 // pred_region
        %p533 = scmp.lt.s32.totalorder %s20, 1
        %s534 = scalar_select %p533, %s20, 1
        %s535 = smul.addr %s534, 3
        %s536 = smul.addr %s535, 8
        %s537 = scalar_lea.vmem %s6, %s536
      $region60: #{deconding_block_forward.6} parent=55 // pred_fallthru
        _
      // Predicated region
      $region61: #{deconding_block_forward.6} parent=55 // pred_check
        %p538 = pneg %p200
      $region62: #{deconding_block_forward.6} parent=55 // pred_check_branch
        %540 = sbr.rel (%p538) target = $region64
      $region63: #{deconding_block_forward.6} parent=55 // pred_region
        %p541 = scmp.lt.s32.totalorder %s20, 1
        %s542 = scalar_select %p541, %s20, 1
        %s543 = smul.addr %s542, 8
        %s544 = scalar_lea.vmem %s7, %s543
      $region64: #{deconding_block_forward.6} parent=55 // pred_fallthru
        _
    $region56: #{deconding_block_forward.6} parent=5 // pred_fallthru
      _
  $region6: #{deconding_block_forward.6} parent=0 // loop_footer
    %s18 = sadd.s32 1, %s14
  $region7: #{deconding_block_forward.6} parent=0 // loop_footer_branch
    %13 = sbr.rel target = $region3
  $region8: #{deconding_block_forward.6} parent=0 // loop_exit
    _

// kernel: deconding_block_forward.7
$region0: #{deconding_block_forward.7}
  #allocation0 [shape = 'u32[]', space=smem, size = 0x4, offset = 0x4, fixed_abs, tag = 'smem constant byte address 0x4 - core index']
  #allocation1 [shape = 'u32[144,128]{1,0:T(1,128)}', space=vmem, size = 0x12000, scoped, tag = 'internal scratch']
  %s0 = inlined_call_operand.vmem [shape: f32[2,128,18], index: 0, kind: input, shape index: {}]
  %s1 = inlined_call_operand.vmem [shape: f32[128,1], index: 1, kind: input, shape index: {}]
  %s2 = inlined_call_operand.vmem [shape: f32[128,1], index: 2, kind: input, shape index: {}]
  %s3 = inlined_call_operand.vmem [shape: f32[16,32], index: 3, kind: input, shape index: {}]
  %s4 = inlined_call_operand.vmem [shape: f32[256,128], index: 4, kind: input, shape index: {}]
  %s5 = inlined_call_operand.hbm [shape: f32[2,256,32], index: 5, kind: output, shape index: {}]
  %s6 = sld [smem:[#allocation0]]
  $region53: #{deconding_block_forward.7} parent=0
    _
  %s8 = ssub.s32 1, %s6
  %s9 = scalar_select 0, %s8, %s6
  $region1: #{deconding_block_forward.7} parent=0
    #allocation2 [shape = 'u8[262144]{0}', space=vmem, size = 0x40000, scoped, tag = 'output window, operand 0']
    #allocation3 [shape = 's32[2]{0}', space=sflag, size = 0x8, scoped, tag = 'scoped memory for deconding_block_forward.7']
    %10 = vsyncpa [#allocation3], 0
    %s11 = scalar_lea.sflag [#allocation3], 1
    %12 = vsyncpa %s11, 0
    loop: start=0, step=1, limit=4
    $region2: #{deconding_block_forward.7} parent=1 // loop_pre_header
      _
    $region3: #{deconding_block_forward.7} parent=1 // loop_header
      %s14 = sphi 0, %s18
      %p15 = scmp.ge.s32.totalorder %s14, 4
      %s21 = sphi 0, %s33
      %s22 = sphi 0, %s29
      %s23 = sphi 0, %s21
      %s24 = sphi 0, %s22
      %s25 = sphi 0, %s23
      %s26 = sphi 0, %s24
      %s38 = sphi 0, %s40
      %s41 = sphi 0, %s38
      %s42 = sphi 0, %s41
      %s58 = sphi 0, %s42
      %s64 = sphi 0, %s66
      %s67 = sphi 0, %s64
      %s68 = sphi 0, %s67
      %s84 = sphi 0, %s68
      %s90 = sphi 0, %s92
      %s93 = sphi 0, %s90
      %s94 = sphi 0, %s93
      %s110 = sphi 0, %s94
      %s114 = sphi 0, %s114
      %s116 = sphi 0, %s114
      %s117 = sphi 0, %s116
      %s131 = sphi 0, %s117
      %s135 = sphi 0, %s135
      %s137 = sphi 0, %s135
      %s138 = sphi 0, %s137
      %s152 = sphi 0, %s138
      %s160 = sphi 0, %s162
      %s163 = sphi 0, %s160
      %s164 = sphi 0, %s163
      %s180 = sphi 0, %s164
    $region4: #{deconding_block_forward.7} parent=1 // loop_header_branch
      %17 = sbr.rel (%p15) target = $region8
    $region5: #{deconding_block_forward.7} parent=1 // loop_body
      %s19 = ssub.s32 %s14, 1
      %s20 = ssub.s32 %s14, 2
      %s27 = sadd.s32 1, %s22
      %p28 = scmp.ge.s32.totalorder %s27, 1
      %s29 = scalar_select %p28, 0, %s27
      %s30 = sadd.s32 1, %s21
      %s31 = scalar_select %p28, %s30, %s21
      %p32 = scmp.ge.s32.totalorder %s31, 2
      %s33 = scalar_select %p32, 0, %s31
      %s34 = ssub.s32 %s21, %s33
      %s35 = ssub.s32 %s22, %s29
      %s36 = sor.u32 %s34, %s35
      %p37 = scmp.eq.s32.totalorder %s36, 0
      %s39 = sadd.s32 %s38, 1
      %s40 = scalar_select %p37, %s38, %s39
      %p43 = pneg %p37
      %p44 = scmp.eq.s32.totalorder %s14, 1
      %p45 = por %p43, %p44
      %p46 = scmp.ne.s32.totalorder %s38, %s41
      %p47 = scmp.eq.s32.totalorder %s14, 0
      %p48 = por %p46, %p47
      %p49 = scmp.ne.s32.totalorder %s38, %s41
      %p50 = scmp.eq.s32.totalorder %s19, 1
      %p51 = por %p49, %p50
      %p52 = scmp.ne.s32.totalorder %s41, %s42
      %p53 = scmp.eq.s32.totalorder %s19, 0
      %p54 = por %p52, %p53
      %p55 = scmp.ne.s32.totalorder %s41, %s42
      %p56 = scmp.eq.s32.totalorder %s20, 1
      %p57 = por %p55, %p56
      %p59 = scmp.ne.s32.totalorder %s42, %s58
      %p60 = scmp.eq.s32.totalorder %s20, 0
      %p61 = por %p59, %p60
      %s62 = ssub.s32 %s22, %s29
      %p63 = scmp.eq.s32.totalorder %s62, 0
      %s65 = sadd.s32 %s64, 1
      %s66 = scalar_select %p63, %s64, %s65
      %p69 = pneg %p63
      %p70 = scmp.eq.s32.totalorder %s14, 1
      %p71 = por %p69, %p70
      %p72 = scmp.ne.s32.totalorder %s64, %s67
      %p73 = scmp.eq.s32.totalorder %s14, 0
      %p74 = por %p72, %p73
      %p75 = scmp.ne.s32.totalorder %s64, %s67
      %p76 = scmp.eq.s32.totalorder %s19, 1
      %p77 = por %p75, %p76
      %p78 = scmp.ne.s32.totalorder %s67, %s68
      %p79 = scmp.eq.s32.totalorder %s19, 0
      %p80 = por %p78, %p79
      %p81 = scmp.ne.s32.totalorder %s67, %s68
      %p82 = scmp.eq.s32.totalorder %s20, 1
      %p83 = por %p81, %p82
      %p85 = scmp.ne.s32.totalorder %s68, %s84
      %p86 = scmp.eq.s32.totalorder %s20, 0
      %p87 = por %p85, %p86
      %s88 = ssub.s32 %s22, %s29
      %p89 = scmp.eq.s32.totalorder %s88, 0
      %s91 = sadd.s32 %s90, 1
      %s92 = scalar_select %p89, %s90, %s91
      %p95 = pneg %p89
      %p96 = scmp.eq.s32.totalorder %s14, 1
      %p97 = por %p95, %p96
      %p98 = scmp.ne.s32.totalorder %s90, %s93
      %p99 = scmp.eq.s32.totalorder %s14, 0
      %p100 = por %p98, %p99
      %p101 = scmp.ne.s32.totalorder %s90, %s93
      %p102 = scmp.eq.s32.totalorder %s19, 1
      %p103 = por %p101, %p102
      %p104 = scmp.ne.s32.totalorder %s93, %s94
      %p105 = scmp.eq.s32.totalorder %s19, 0
      %p106 = por %p104, %p105
      %p107 = scmp.ne.s32.totalorder %s93, %s94
      %p108 = scmp.eq.s32.totalorder %s20, 1
      %p109 = por %p107, %p108
      %p111 = scmp.ne.s32.totalorder %s94, %s110
      %p112 = scmp.eq.s32.totalorder %s20, 0
      %p113 = por %p111, %p112
      %s115 = sadd.s32 %s114, 1
      %p118 = scmp.eq.s32.totalorder %s14, 1
      %p119 = scmp.ne.s32.totalorder %s114, %s116
      %p120 = scmp.eq.s32.totalorder %s14, 0
      %p121 = por %p119, %p120
      %p122 = scmp.ne.s32.totalorder %s114, %s116
      %p123 = scmp.eq.s32.totalorder %s19, 1
      %p124 = por %p122, %p123
      %p125 = scmp.ne.s32.totalorder %s116, %s117
      %p126 = scmp.eq.s32.totalorder %s19, 0
      %p127 = por %p125, %p126
      %p128 = scmp.ne.s32.totalorder %s116, %s117
      %p129 = scmp.eq.s32.totalorder %s20, 1
      %p130 = por %p128, %p129
      %p132 = scmp.ne.s32.totalorder %s117, %s131
      %p133 = scmp.eq.s32.totalorder %s20, 0
      %p134 = por %p132, %p133
      %s136 = sadd.s32 %s135, 1
      %p139 = scmp.eq.s32.totalorder %s14, 1
      %p140 = scmp.ne.s32.totalorder %s135, %s137
      %p141 = scmp.eq.s32.totalorder %s14, 0
      %p142 = por %p140, %p141
      %p143 = scmp.ne.s32.totalorder %s135, %s137
      %p144 = scmp.eq.s32.totalorder %s19, 1
      %p145 = por %p143, %p144
      %p146 = scmp.ne.s32.totalorder %s137, %s138
      %p147 = scmp.eq.s32.totalorder %s19, 0
      %p148 = por %p146, %p147
      %p149 = scmp.ne.s32.totalorder %s137, %s138
      %p150 = scmp.eq.s32.totalorder %s20, 1
      %p151 = por %p149, %p150
      %p153 = scmp.ne.s32.totalorder %s138, %s152
      %p154 = scmp.eq.s32.totalorder %s20, 0
      %p155 = por %p153, %p154
      %s156 = ssub.s32 %s21, %s33
      %s157 = ssub.s32 %s22, %s29
      %s158 = sor.u32 %s156, %s157
      %p159 = scmp.eq.s32.totalorder %s158, 0
      %s161 = sadd.s32 %s160, 1
      %s162 = scalar_select %p159, %s160, %s161
      %p165 = pneg %p159
      %p166 = scmp.eq.s32.totalorder %s14, 1
      %p167 = por %p165, %p166
      %p168 = scmp.ne.s32.totalorder %s160, %s163
      %p169 = scmp.eq.s32.totalorder %s14, 0
      %p170 = por %p168, %p169
      %p171 = scmp.ne.s32.totalorder %s160, %s163
      %p172 = scmp.eq.s32.totalorder %s19, 1
      %p173 = por %p171, %p172
      %p174 = scmp.ne.s32.totalorder %s163, %s164
      %p175 = scmp.eq.s32.totalorder %s19, 0
      %p176 = por %p174, %p175
      %p177 = scmp.ne.s32.totalorder %s163, %s164
      %p178 = scmp.eq.s32.totalorder %s20, 1
      %p179 = por %p177, %p178
      %p181 = scmp.ne.s32.totalorder %s164, %s180
      %p182 = scmp.eq.s32.totalorder %s20, 0
      %p183 = por %p181, %p182
      %p184 = scmp.le.s32.totalorder 1, %s14
      %p185 = scmp.lt.s32.totalorder %s14, 3
      %p186 = pnand %p184, %p185
      %p187 = pneg %p186
      // Predicated region
      $region9: #{deconding_block_forward.7} parent=5 // pred_check
        _
      $region10: #{deconding_block_forward.7} parent=5 // pred_check_branch
        %189 = sbr.rel (%p186) target = $region12
      $region11: #{deconding_block_forward.7} parent=5 // pred_region
        %s190 = ssub.s32 %s14, 1
        // Predicated region
        $region13: #{deconding_block_forward.7} parent=11 // pred_check
          %p191 = pneg %p80
        $region14: #{deconding_block_forward.7} parent=11 // pred_check_branch
          %193 = sbr.rel (%p191) target = $region16
        $region15: #{deconding_block_forward.7} parent=11 // pred_region
          %s194 = smul.u32 16, %s24
          %p195 = scmp.lt.s32.totalorder %s194, 15
          %s196 = scalar_select %p195, %s194, 15
          %s197 = smul.addr %s196, 8
          %s198 = scalar_lea.vmem %s1, %s197
          %s199 = smul.u32 16, %s24
        $region16: #{deconding_block_forward.7} parent=11 // pred_fallthru
          _
        // Predicated region
        $region17: #{deconding_block_forward.7} parent=11 // pred_check
          %p200 = pneg %p106
        $region18: #{deconding_block_forward.7} parent=11 // pred_check_branch
          %202 = sbr.rel (%p200) target = $region20
        $region19: #{deconding_block_forward.7} parent=11 // pred_region
          %s203 = smul.u32 16, %s24
          %p204 = scmp.lt.s32.totalorder %s203, 15
          %s205 = scalar_select %p204, %s203, 15
          %s206 = smul.addr %s205, 8
          %s207 = scalar_lea.vmem %s2, %s206
          %s208 = smul.u32 16, %s24
        $region20: #{deconding_block_forward.7} parent=11 // pred_fallthru
          _
        // Predicated region
        $region21: #{deconding_block_forward.7} parent=11 // pred_check
          %p209 = pneg %p127
        $region22: #{deconding_block_forward.7} parent=11 // pred_check_branch
          %211 = sbr.rel (%p209) target = $region24
        $region23: #{deconding_block_forward.7} parent=11 // pred_region
          _
        $region24: #{deconding_block_forward.7} parent=11 // pred_fallthru
          _
        // Predicated region
        $region25: #{deconding_block_forward.7} parent=11 // pred_check
          %p212 = pneg %p148
        $region26: #{deconding_block_forward.7} parent=11 // pred_check_branch
          %214 = sbr.rel (%p212) target = $region28
        $region27: #{deconding_block_forward.7} parent=11 // pred_region
          _
        $region28: #{deconding_block_forward.7} parent=11 // pred_fallthru
          _
      $region12: #{deconding_block_forward.7} parent=5 // pred_fallthru
        _
      %p215 = scmp.lt.s32.totalorder %s14, 2
      // Predicated region
      $region29: #{deconding_block_forward.7} parent=5 // pred_check
        %p216 = pneg %p215
      $region30: #{deconding_block_forward.7} parent=5 // pred_check_branch
        %218 = sbr.rel (%p216) target = $region32
      $region31: #{deconding_block_forward.7} parent=5 // pred_region
        // Predicated region
        $region33: #{deconding_block_forward.7} parent=31 // pred_check
          %p219 = pneg %p48
        $region34: #{deconding_block_forward.7} parent=31 // pred_check_branch
          %221 = sbr.rel (%p219) target = $region36
        $region35: #{deconding_block_forward.7} parent=31 // pred_region
          %s222 = smul.u32 16, %s22
          %p223 = scmp.lt.s32.totalorder %s21, 1
          %s224 = scalar_select %p223, %s21, 1
          %p225 = scmp.lt.s32.totalorder %s222, 15
          %s226 = scalar_select %p225, %s222, 15
          %s227 = smul.addr %s224, 16
          %s228 = sadd.s32 %s226, %s227
          %s229 = smul.addr %s228, 8
          %s230 = scalar_lea.vmem %s0, %s229
          %s231 = smul.u32 16, %s22
        $region36: #{deconding_block_forward.7} parent=31 // pred_fallthru
          _
      $region32: #{deconding_block_forward.7} parent=5 // pred_fallthru
        _
      %p232 = scmp.le.s32.totalorder 1, %s14
      %p233 = scmp.lt.s32.totalorder %s14, 3
      %p234 = pnand %p232, %p233
      %p235 = pneg %p234
      // Predicated region
      $region37: #{deconding_block_forward.7} parent=5 // pred_check
        _
      $region38: #{deconding_block_forward.7} parent=5 // pred_check_branch
        %237 = sbr.rel (%p234) target = $region40
      $region39: #{deconding_block_forward.7} parent=5 // pred_region
        %s238 = ssub.s32 %s14, 1
        %s239 = smul.u32 16, %s24
        %p240 = scmp.lt.s32.totalorder %s23, 1
        %s241 = scalar_select %p240, %s23, 1
        %p242 = scmp.lt.s32.totalorder %s239, 15
        %s243 = scalar_select %p242, %s239, 15
        %s244 = smul.addr %s241, 16
        %s245 = sadd.s32 %s243, %s244
        %s246 = smul.addr %s245, 8
        %s247 = scalar_lea.vmem %s0, %s246
        %p248 = pneg %p54
        %p249 = pneg %p51
        %s250 = smul.u32 16, %s24
        %p251 = scmp.lt.s32.totalorder %s250, 15
        %s252 = scalar_select %p251, %s250, 15
        %s253 = smul.addr %s252, 8
        %s254 = scalar_lea.vmem %s1, %s253
        %p255 = pneg %p80
        %p256 = pneg %p77
        %s257 = smul.u32 16, %s24
        %p258 = scmp.lt.s32.totalorder %s257, 15
        %s259 = scalar_select %p258, %s257, 15
        %s260 = smul.addr %s259, 8
        %s261 = scalar_lea.vmem %s2, %s260
        %p262 = pneg %p106
        %p263 = pneg %p103
        %p264 = pneg %p127
        %p265 = pneg %p124
        %p266 = pneg %p148
        %p267 = pneg %p145
        %p268 = pneg %p176
        %p269 = pneg %p173
        %s270 = sand.u32 %s163, 1
        %s271 = scalar_lea.sflag [#allocation3], %s270
        %s272 = sand.u32 %s163, 1
        %s273 = smul.addr %s272, 256
        %s274 = scalar_lea.vmem [#allocation2], %s273
        %s275 = smul.u32 16, %s24
        %p276 = scmp.lt.s32.totalorder %s23, 1
        %s277 = scalar_select %p276, %s23, 1
        %p278 = scmp.lt.s32.totalorder %s275, 15
        %s279 = scalar_select %p278, %s275, 15
        %s280 = smul.addr %s277, 16
        %s281 = sadd.s32 %s279, %s280
        %s282 = smul.addr %s281, 8
        %s283 = scalar_lea.vmem %s0, %s282
        %s284 = smul.u32 16, %s24
        %s285 = smul.u32 16, %s24
        %p286 = scmp.lt.s32.totalorder %s285, 15
        %s287 = scalar_select %p286, %s285, 15
        %s288 = smul.addr %s287, 8
        %s289 = scalar_lea.vmem %s1, %s288
        %s290 = smul.u32 16, %s24
        %s291 = smul.u32 16, %s24
        %p292 = scmp.lt.s32.totalorder %s291, 15
        %s293 = scalar_select %p292, %s291, 15
        %s294 = smul.addr %s293, 8
        %s295 = scalar_lea.vmem %s2, %s294
        %s296 = smul.u32 16, %s24
        %s297 = smul.u32 32, %s24
        %v298 = vld [vmem:[%s283] sm:$0xff]
        %v299 = vld [vmem:[%s283 + $0x8] sm:$0xff]
        %v300 = vld [vmem:[%s283 + $0x10] sm:$0xff]
        %v301 = vld [vmem:[%s283 + $0x18] sm:$0xff]
        %v302 = vld [vmem:[%s283 + $0x20] sm:$0xff]
        %v303 = vld [vmem:[%s283 + $0x28] sm:$0xff]
        %v304 = vld [vmem:[%s283 + $0x30] sm:$0xff]
        %v305 = vld [vmem:[%s283 + $0x38] sm:$0xff]
        %v306 = vld [vmem:[%s283 + $0x40] sm:$0xff]
        %v307 = vld [vmem:[%s283 + $0x48] sm:$0xff]
        %v308 = vld [vmem:[%s283 + $0x50] sm:$0xff]
        %v309 = vld [vmem:[%s283 + $0x58] sm:$0xff]
        %v310 = vld [vmem:[%s283 + $0x60] sm:$0xff]
        %v311 = vld [vmem:[%s283 + $0x68] sm:$0xff]
        %v312 = vld [vmem:[%s283 + $0x70] sm:$0xff]
        %v313 = vld [vmem:[%s283 + $0x78] sm:$0xff]
        %v314 = vld [vmem:[%s289] sm:$0xff]
        %v315 = vld [vmem:[%s289 + $0x8] sm:$0xff]
        %v316 = vld [vmem:[%s289 + $0x10] sm:$0xff]
        %v317 = vld [vmem:[%s289 + $0x18] sm:$0xff]
        %v318 = vld [vmem:[%s289 + $0x20] sm:$0xff]
        %v319 = vld [vmem:[%s289 + $0x28] sm:$0xff]
        %v320 = vld [vmem:[%s289 + $0x30] sm:$0xff]
        %v321 = vld [vmem:[%s289 + $0x38] sm:$0xff]
        %v322 = vld [vmem:[%s289 + $0x40] sm:$0xff]
        %v323 = vld [vmem:[%s289 + $0x48] sm:$0xff]
        %v324 = vld [vmem:[%s289 + $0x50] sm:$0xff]
        %v325 = vld [vmem:[%s289 + $0x58] sm:$0xff]
        %v326 = vld [vmem:[%s289 + $0x60] sm:$0xff]
        %v327 = vld [vmem:[%s289 + $0x68] sm:$0xff]
        %v328 = vld [vmem:[%s289 + $0x70] sm:$0xff]
        %v329 = vld [vmem:[%s289 + $0x78] sm:$0xff]
        %331 = vset.pattern.permute.xlu0 0
        %332 = vperm.xlu0 %331, %v314
        %v333 = vpop.permute.xlu0 %332
        %336 = vset.pattern.permute.xlu0 0
        %337 = vperm.xlu0 %336, %v315
        %v338 = vpop.permute.xlu0 %337
        %341 = vset.pattern.permute.xlu0 0
        %342 = vperm.xlu0 %341, %v316
        %v343 = vpop.permute.xlu0 %342
        %346 = vset.pattern.permute.xlu0 0
        %347 = vperm.xlu0 %346, %v317
        %v348 = vpop.permute.xlu0 %347
        %351 = vset.pattern.permute.xlu0 0
        %352 = vperm.xlu0 %351, %v318
        %v353 = vpop.permute.xlu0 %352
        %356 = vset.pattern.permute.xlu0 0
        %357 = vperm.xlu0 %356, %v319
        %v358 = vpop.permute.xlu0 %357
        %361 = vset.pattern.permute.xlu0 0
        %362 = vperm.xlu0 %361, %v320
        %v363 = vpop.permute.xlu0 %362
        %366 = vset.pattern.permute.xlu0 0
        %367 = vperm.xlu0 %366, %v321
        %v368 = vpop.permute.xlu0 %367
        %371 = vset.pattern.permute.xlu0 0
        %372 = vperm.xlu0 %371, %v322
        %v373 = vpop.permute.xlu0 %372
        %376 = vset.pattern.permute.xlu0 0
        %377 = vperm.xlu0 %376, %v323
        %v378 = vpop.permute.xlu0 %377
        %381 = vset.pattern.permute.xlu0 0
        %382 = vperm.xlu0 %381, %v324
        %v383 = vpop.permute.xlu0 %382
        %386 = vset.pattern.permute.xlu0 0
        %387 = vperm.xlu0 %386, %v325
        %v388 = vpop.permute.xlu0 %387
        %391 = vset.pattern.permute.xlu0 0
        %392 = vperm.xlu0 %391, %v326
        %v393 = vpop.permute.xlu0 %392
        %396 = vset.pattern.permute.xlu0 0
        %397 = vperm.xlu0 %396, %v327
        %v398 = vpop.permute.xlu0 %397
        %401 = vset.pattern.permute.xlu0 0
        %402 = vperm.xlu0 %401, %v328
        %v403 = vpop.permute.xlu0 %402
        %406 = vset.pattern.permute.xlu0 0
        %407 = vperm.xlu0 %406, %v329
        %v408 = vpop.permute.xlu0 %407
        %v410 = vmul.f32 %v298, %v333
        %v411 = vmul.f32 %v299, %v338
        %v412 = vmul.f32 %v300, %v343
        %v413 = vmul.f32 %v301, %v348
        %v414 = vmul.f32 %v302, %v353
        %v415 = vmul.f32 %v303, %v358
        %v416 = vmul.f32 %v304, %v363
        %v417 = vmul.f32 %v305, %v368
        %v418 = vmul.f32 %v306, %v373
        %v419 = vmul.f32 %v307, %v378
        %v420 = vmul.f32 %v308, %v383
        %v421 = vmul.f32 %v309, %v388
        %v422 = vmul.f32 %v310, %v393
        %v423 = vmul.f32 %v311, %v398
        %v424 = vmul.f32 %v312, %v403
        %v425 = vmul.f32 %v313, %v408
        %v426 = vld [vmem:[%s295] sm:$0xff]
        %v427 = vld [vmem:[%s295 + $0x8] sm:$0xff]
        %v428 = vld [vmem:[%s295 + $0x10] sm:$0xff]
        %v429 = vld [vmem:[%s295 + $0x18] sm:$0xff]
        %v430 = vld [vmem:[%s295 + $0x20] sm:$0xff]
        %v431 = vld [vmem:[%s295 + $0x28] sm:$0xff]
        %v432 = vld [vmem:[%s295 + $0x30] sm:$0xff]
        %v433 = vld [vmem:[%s295 + $0x38] sm:$0xff]
        %v434 = vld [vmem:[%s295 + $0x40] sm:$0xff]
        %v435 = vld [vmem:[%s295 + $0x48] sm:$0xff]
        %v436 = vld [vmem:[%s295 + $0x50] sm:$0xff]
        %v437 = vld [vmem:[%s295 + $0x58] sm:$0xff]
        %v438 = vld [vmem:[%s295 + $0x60] sm:$0xff]
        %v439 = vld [vmem:[%s295 + $0x68] sm:$0xff]
        %v440 = vld [vmem:[%s295 + $0x70] sm:$0xff]
        %v441 = vld [vmem:[%s295 + $0x78] sm:$0xff]
        %443 = vset.pattern.permute.xlu0 0
        %444 = vperm.xlu0 %443, %v426
        %v445 = vpop.permute.xlu0 %444
        %448 = vset.pattern.permute.xlu0 0
        %449 = vperm.xlu0 %448, %v427
        %v450 = vpop.permute.xlu0 %449
        %453 = vset.pattern.permute.xlu0 0
        %454 = vperm.xlu0 %453, %v428
        %v455 = vpop.permute.xlu0 %454
        %458 = vset.pattern.permute.xlu0 0
        %459 = vperm.xlu0 %458, %v429
        %v460 = vpop.permute.xlu0 %459
        %463 = vset.pattern.permute.xlu0 0
        %464 = vperm.xlu0 %463, %v430
        %v465 = vpop.permute.xlu0 %464
        %468 = vset.pattern.permute.xlu0 0
        %469 = vperm.xlu0 %468, %v431
        %v470 = vpop.permute.xlu0 %469
        %473 = vset.pattern.permute.xlu0 0
        %474 = vperm.xlu0 %473, %v432
        %v475 = vpop.permute.xlu0 %474
        %478 = vset.pattern.permute.xlu0 0
        %479 = vperm.xlu0 %478, %v433
        %v480 = vpop.permute.xlu0 %479
        %483 = vset.pattern.permute.xlu0 0
        %484 = vperm.xlu0 %483, %v434
        %v485 = vpop.permute.xlu0 %484
        %488 = vset.pattern.permute.xlu0 0
        %489 = vperm.xlu0 %488, %v435
        %v490 = vpop.permute.xlu0 %489
        %493 = vset.pattern.permute.xlu0 0
        %494 = vperm.xlu0 %493, %v436
        %v495 = vpop.permute.xlu0 %494
        %498 = vset.pattern.permute.xlu0 0
        %499 = vperm.xlu0 %498, %v437
        %v500 = vpop.permute.xlu0 %499
        %503 = vset.pattern.permute.xlu0 0
        %504 = vperm.xlu0 %503, %v438
        %v505 = vpop.permute.xlu0 %504
        %508 = vset.pattern.permute.xlu0 0
        %509 = vperm.xlu0 %508, %v439
        %v510 = vpop.permute.xlu0 %509
        %513 = vset.pattern.permute.xlu0 0
        %514 = vperm.xlu0 %513, %v440
        %v515 = vpop.permute.xlu0 %514
        %518 = vset.pattern.permute.xlu0 0
        %519 = vperm.xlu0 %518, %v441
        %v520 = vpop.permute.xlu0 %519
        %v522 = vadd.f32 %v410, %v445
        %v523 = vadd.f32 %v411, %v450
        %v524 = vadd.f32 %v412, %v455
        %v525 = vadd.f32 %v413, %v460
        %v526 = vadd.f32 %v414, %v465
        %v527 = vadd.f32 %v415, %v470
        %v528 = vadd.f32 %v416, %v475
        %v529 = vadd.f32 %v417, %v480
        %v530 = vadd.f32 %v418, %v485
        %v531 = vadd.f32 %v419, %v490
        %v532 = vadd.f32 %v420, %v495
        %v533 = vadd.f32 %v421, %v500
        %v534 = vadd.f32 %v422, %v505
        %v535 = vadd.f32 %v423, %v510
        %v536 = vadd.f32 %v424, %v515
        %v537 = vadd.f32 %v425, %v520
        %v538 = vmul.f32 %v522, 0.01
        %v539 = vmul.f32 %v523, 0.01
        %v540 = vmul.f32 %v524, 0.01
        %v541 = vmul.f32 %v525, 0.01
        %v542 = vmul.f32 %v526, 0.01
        %v543 = vmul.f32 %v527, 0.01
        %v544 = vmul.f32 %v528, 0.01
        %v545 = vmul.f32 %v529, 0.01
        %v546 = vmul.f32 %v530, 0.01
        %v547 = vmul.f32 %v531, 0.01
        %v548 = vmul.f32 %v532, 0.01
        %v549 = vmul.f32 %v533, 0.01
        %v550 = vmul.f32 %v534, 0.01
        %v551 = vmul.f32 %v535, 0.01
        %v552 = vmul.f32 %v536, 0.01
        %v553 = vmul.f32 %v537, 0.01
        %v554 = vmax.f32 %v522, %v538
        %v555 = vmax.f32 %v523, %v539
        %v556 = vmax.f32 %v524, %v540
        %v557 = vmax.f32 %v525, %v541
        %v558 = vmax.f32 %v526, %v542
        %v559 = vmax.f32 %v527, %v543
        %v560 = vmax.f32 %v528, %v544
        %v561 = vmax.f32 %v529, %v545
        %v562 = vmax.f32 %v530, %v546
        %v563 = vmax.f32 %v531, %v547
        %v564 = vmax.f32 %v532, %v548
        %v565 = vmax.f32 %v533, %v549
        %v566 = vmax.f32 %v534, %v550
        %v567 = vmax.f32 %v535, %v551
        %v568 = vmax.f32 %v536, %v552
        %v569 = vmax.f32 %v537, %v553
        %v570 = vld [vmem:[%s3] sm:$0xff]
        %v571 = vld [vmem:[%s3 + $0x8] sm:$0xff]
        %vm572 = vcmask 130048
        %v574 = vsel %vm572, %v554, 0
        %v577 = vsel %vm572, %v555, 0
        %v580 = vsel %vm572, %v556, 0
        %v583 = vsel %vm572, %v557, 0
        %v586 = vsel %vm572, %v558, 0
        %v589 = vsel %vm572, %v559, 0
        %v592 = vsel %vm572, %v560, 0
        %v595 = vsel %vm572, %v561, 0
        %v598 = vsel %vm572, %v562, 0
        %v601 = vsel %vm572, %v563, 0
        %v604 = vsel %vm572, %v564, 0
        %v607 = vsel %vm572, %v565, 0
        %v610 = vsel %vm572, %v566, 0
        %v613 = vsel %vm572, %v567, 0
        %v616 = vsel %vm572, %v568, 0
        %v619 = vsel %vm572, %v569, 0
        %621 = vmatprep.subr.mxu0 0.0
        %622 = vmatpush1.msra.mxu0 %v570
        %623 = vmatprep.subr.mxu0 0.0
        %624 = vmatpush1.msra.mxu0 %v571
        %625 = vmatprep.subr.mxu0 0.0
        %626 = vmatpush1.msra.mxu0 0.0
        %627 = vmatprep.subr.mxu0 0.0
        %628 = vmatpush1.msra.mxu0 0.0
        %629 = vmatprep.subr.mxu0 0.0
        %630 = vmatpush1.msra.mxu0 0.0
        %631 = vmatprep.subr.mxu0 0.0
        %632 = vmatpush1.msra.mxu0 0.0
        %633 = vmatprep.subr.mxu0 0.0
        %634 = vmatpush1.msra.mxu0 0.0
        %635 = vmatprep.subr.mxu0 0.0
        %636 = vmatpush1.msra.mxu0 0.0
        %637 = vmatprep.subr.mxu0 0.0
        %638 = vmatpush1.msra.mxu0 0.0
        %639 = vmatprep.subr.mxu0 0.0
        %640 = vmatpush1.msra.mxu0 0.0
        %641 = vmatprep.subr.mxu0 0.0
        %642 = vmatpush1.msra.mxu0 0.0
        %643 = vmatprep.subr.mxu0 0.0
        %644 = vmatpush1.msra.mxu0 0.0
        %645 = vmatprep.subr.mxu0 0.0
        %646 = vmatpush1.msra.mxu0 0.0
        %647 = vmatprep.subr.mxu0 0.0
        %648 = vmatpush1.msra.mxu0 0.0
        %649 = vmatprep.subr.mxu0 0.0
        %650 = vmatpush1.msra.mxu0 0.0
        %651 = vmatprep.subr.mxu0 0.0
        %652 = vmatpush1.msra.mxu0 0.0
        %653 = vmatprep.subr.mxu0 0.0
        %654 = vmatpush1.msra.mxu0 0.0
        %655 = vmatprep.subr.mxu0 0.0
        %656 = vmatpush1.msra.mxu0 0.0
        %657 = vmatprep.subr.mxu0 0.0
        %658 = vmatpush1.msra.mxu0 0.0
        %659 = vmatprep.subr.mxu0 0.0
        %660 = vmatpush1.msra.mxu0 0.0
        %661 = vmatprep.subr.mxu0 0.0
        %662 = vmatpush1.msra.mxu0 0.0
        %663 = vmatprep.subr.mxu0 0.0
        %664 = vmatpush1.msra.mxu0 0.0
        %665 = vmatprep.subr.mxu0 0.0
        %666 = vmatpush1.msra.mxu0 0.0
        %667 = vmatprep.subr.mxu0 0.0
        %668 = vmatpush1.msra.mxu0 0.0
        %669 = vmatprep.subr.mxu0 0.0
        %670 = vmatpush1.msra.mxu0 0.0
        %671 = vmatprep.subr.mxu0 0.0
        %672 = vmatpush1.msra.mxu0 0.0
        %673 = vmatprep.subr.mxu0 0.0
        %674 = vmatpush1.msra.mxu0 0.0
        %675 = vmatprep.subr.mxu0 0.0
        %676 = vmatpush1.msra.mxu0 0.0
        %677 = vmatprep.subr.mxu0 0.0
        %678 = vmatpush1.msra.mxu0 0.0
        %679 = vmatprep.subr.mxu0 0.0
        %680 = vmatpush1.msra.mxu0 0.0
        %681 = vmatprep.subr.mxu0 0.0
        %682 = vmatpush1.msra.mxu0 0.0
        %683 = vmatprep.subr.mxu0 0.0
        %684 = vmatpush1.msra.mxu0 0.0
        %685 = vmatprep.mubr.f32.mxu0 0.0
        %686 = vmatmul.mubr.f32.gmra.mrb[0].mxu0 %v574
        %v687 = vpop.f32.mrb[0].mxu0
        %v688 = vadd.f32 0.0, %v687
        %v689 = vpop.f32.mrb[0].mxu0
        %690 = vmatprep.mubr.f32.mxu0 0.0
        %691 = vmatmul.mubr.f32.gmra.mrb[0].mxu0 %v577
        %v692 = vpop.f32.mrb[0].mxu0
        %v693 = vadd.f32 0.0, %v692
        %v694 = vpop.f32.mrb[0].mxu0
        %695 = vmatprep.mubr.f32.mxu0 0.0
        %696 = vmatmul.mubr.f32.gmra.mrb[0].mxu0 %v580
        %v697 = vpop.f32.mrb[0].mxu0
        %v698 = vadd.f32 0.0, %v697
        %v699 = vpop.f32.mrb[0].mxu0
        %700 = vmatprep.mubr.f32.mxu0 0.0
        %701 = vmatmul.mubr.f32.gmra.mrb[0].mxu0 %v583
        %v702 = vpop.f32.mrb[0].mxu0
        %v703 = vadd.f32 0.0, %v702
        %v704 = vpop.f32.mrb[0].mxu0
        %705 = vmatprep.mubr.f32.mxu0 0.0
        %706 = vmatmul.mubr.f32.gmra.mrb[0].mxu0 %v586
        %v707 = vpop.f32.mrb[0].mxu0
        %v708 = vadd.f32 0.0, %v707
        %v709 = vpop.f32.mrb[0].mxu0
        %710 = vmatprep.mubr.f32.mxu0 0.0
        %711 = vmatmul.mubr.f32.gmra.mrb[0].mxu0 %v589
        %v712 = vpop.f32.mrb[0].mxu0
        %v713 = vadd.f32 0.0, %v712
        %v714 = vpop.f32.mrb[0].mxu0
        %715 = vmatprep.mubr.f32.mxu0 0.0
        %716 = vmatmul.mubr.f32.gmra.mrb[0].mxu0 %v592
        %v717 = vpop.f32.mrb[0].mxu0
        %v718 = vadd.f32 0.0, %v717
        %v719 = vpop.f32.mrb[0].mxu0
        %720 = vmatprep.mubr.f32.mxu0 0.0
        %721 = vmatmul.mubr.f32.gmra.mrb[0].mxu0 %v595
        %v722 = vpop.f32.mrb[0].mxu0
        %v723 = vadd.f32 0.0, %v722
        %v724 = vpop.f32.mrb[0].mxu0
        %725 = vmatprep.mubr.f32.mxu0 0.0
        %726 = vmatmul.mubr.f32.gmra.mrb[0].mxu0 %v598
        %v727 = vpop.f32.mrb[0].mxu0
        %v728 = vadd.f32 0.0, %v727
        %v729 = vpop.f32.mrb[0].mxu0
        %730 = vmatprep.mubr.f32.mxu0 0.0
        %731 = vmatmul.mubr.f32.gmra.mrb[0].mxu0 %v601
        %v732 = vpop.f32.mrb[0].mxu0
        %v733 = vadd.f32 0.0, %v732
        %v734 = vpop.f32.mrb[0].mxu0
        %735 = vmatprep.mubr.f32.mxu0 0.0
        %736 = vmatmul.mubr.f32.gmra.mrb[0].mxu0 %v604
        %v737 = vpop.f32.mrb[0].mxu0
        %v738 = vadd.f32 0.0, %v737
        %v739 = vpop.f32.mrb[0].mxu0
        %740 = vmatprep.mubr.f32.mxu0 0.0
        %741 = vmatmul.mubr.f32.gmra.mrb[0].mxu0 %v607
        %v742 = vpop.f32.mrb[0].mxu0
        %v743 = vadd.f32 0.0, %v742
        %v744 = vpop.f32.mrb[0].mxu0
        %745 = vmatprep.mubr.f32.mxu0 0.0
        %746 = vmatmul.mubr.f32.gmra.mrb[0].mxu0 %v610
        %v747 = vpop.f32.mrb[0].mxu0
        %v748 = vadd.f32 0.0, %v747
        %v749 = vpop.f32.mrb[0].mxu0
        %750 = vmatprep.mubr.f32.mxu0 0.0
        %751 = vmatmul.mubr.f32.gmra.mrb[0].mxu0 %v613
        %v752 = vpop.f32.mrb[0].mxu0
        %v753 = vadd.f32 0.0, %v752
        %v754 = vpop.f32.mrb[0].mxu0
        %755 = vmatprep.mubr.f32.mxu0 0.0
        %756 = vmatmul.mubr.f32.gmra.mrb[0].mxu0 %v616
        %v757 = vpop.f32.mrb[0].mxu0
        %v758 = vadd.f32 0.0, %v757
        %v759 = vpop.f32.mrb[0].mxu0
        %760 = vmatprep.mubr.f32.mxu0 0.0
        %761 = vmatmul.mubr.f32.gmra.mrb[0].mxu0 %v619
        %v762 = vpop.f32.mrb[0].mxu0
        %v763 = vadd.f32 0.0, %v762
        %v764 = vpop.f32.mrb[0].mxu0
        %765 = vdwg.mxu0
        %v766 = vld [vmem:[%s4] sm:$0xff]
        %v767 = vld [vmem:[%s4 + $0x8] sm:$0xff]
        %v768 = vld [vmem:[%s4 + $0x10] sm:$0xff]
        %v769 = vld [vmem:[%s4 + $0x18] sm:$0xff]
        %v770 = vld [vmem:[%s4 + $0x20] sm:$0xff]
        %v771 = vld [vmem:[%s4 + $0x28] sm:$0xff]
        %v772 = vld [vmem:[%s4 + $0x30] sm:$0xff]
        %v773 = vld [vmem:[%s4 + $0x38] sm:$0xff]
        %v774 = vld [vmem:[%s4 + $0x40] sm:$0xff]
        %v775 = vld [vmem:[%s4 + $0x48] sm:$0xff]
        %v776 = vld [vmem:[%s4 + $0x50] sm:$0xff]
        %v777 = vld [vmem:[%s4 + $0x58] sm:$0xff]
        %v778 = vld [vmem:[%s4 + $0x60] sm:$0xff]
        %v779 = vld [vmem:[%s4 + $0x68] sm:$0xff]
        %v780 = vld [vmem:[%s4 + $0x70] sm:$0xff]
        %v781 = vld [vmem:[%s4 + $0x78] sm:$0xff]
        %v782 = vld [vmem:[%s4 + $0x80] sm:$0xff]
        %v783 = vld [vmem:[%s4 + $0x88] sm:$0xff]
        %v784 = vld [vmem:[%s4 + $0x90] sm:$0xff]
        %v785 = vld [vmem:[%s4 + $0x98] sm:$0xff]
        %v786 = vld [vmem:[%s4 + $0xa0] sm:$0xff]
        %v787 = vld [vmem:[%s4 + $0xa8] sm:$0xff]
        %v788 = vld [vmem:[%s4 + $0xb0] sm:$0xff]
        %v789 = vld [vmem:[%s4 + $0xb8] sm:$0xff]
        %v790 = vld [vmem:[%s4 + $0xc0] sm:$0xff]
        %v791 = vld [vmem:[%s4 + $0xc8] sm:$0xff]
        %v792 = vld [vmem:[%s4 + $0xd0] sm:$0xff]
        %v793 = vld [vmem:[%s4 + $0xd8] sm:$0xff]
        %v794 = vld [vmem:[%s4 + $0xe0] sm:$0xff]
        %v795 = vld [vmem:[%s4 + $0xe8] sm:$0xff]
        %v796 = vld [vmem:[%s4 + $0xf0] sm:$0xff]
        %v797 = vld [vmem:[%s4 + $0xf8] sm:$0xff]
        %798 = vmatprep.subr.mxu0 0.0
        %799 = vmatpush1.msra.mxu0 %v688
        %800 = vmatprep.subr.mxu0 0.0
        %801 = vmatpush1.msra.mxu0 %v693
        %802 = vmatprep.subr.mxu0 0.0
        %803 = vmatpush1.msra.mxu0 %v698
        %804 = vmatprep.subr.mxu0 0.0
        %805 = vmatpush1.msra.mxu0 %v703
        %806 = vmatprep.subr.mxu0 0.0
        %807 = vmatpush1.msra.mxu0 %v708
        %808 = vmatprep.subr.mxu0 0.0
        %809 = vmatpush1.msra.mxu0 %v713
        %810 = vmatprep.subr.mxu0 0.0
        %811 = vmatpush1.msra.mxu0 %v718
        %812 = vmatprep.subr.mxu0 0.0
        %813 = vmatpush1.msra.mxu0 %v723
        %814 = vmatprep.subr.mxu0 0.0
        %815 = vmatpush1.msra.mxu0 %v728
        %816 = vmatprep.subr.mxu0 0.0
        %817 = vmatpush1.msra.mxu0 %v733
        %818 = vmatprep.subr.mxu0 0.0
        %819 = vmatpush1.msra.mxu0 %v738
        %820 = vmatprep.subr.mxu0 0.0
        %821 = vmatpush1.msra.mxu0 %v743
        %822 = vmatprep.subr.mxu0 0.0
        %823 = vmatpush1.msra.mxu0 %v748
        %824 = vmatprep.subr.mxu0 0.0
        %825 = vmatpush1.msra.mxu0 %v753
        %826 = vmatprep.subr.mxu0 0.0
        %827 = vmatpush1.msra.mxu0 %v758
        %828 = vmatprep.subr.mxu0 0.0
        %829 = vmatpush1.msra.mxu0 %v763
        %830 = vmatprep.subr.mxu0 0.0
        %831 = vmatpush1.msra.mxu0 0.0
        %832 = vmatprep.subr.mxu0 0.0
        %833 = vmatpush1.msra.mxu0 0.0
        %834 = vmatprep.subr.mxu0 0.0
        %835 = vmatpush1.msra.mxu0 0.0
        %836 = vmatprep.subr.mxu0 0.0
        %837 = vmatpush1.msra.mxu0 0.0
        %838 = vmatprep.subr.mxu0 0.0
        %839 = vmatpush1.msra.mxu0 0.0
        %840 = vmatprep.subr.mxu0 0.0
        %841 = vmatpush1.msra.mxu0 0.0
        %842 = vmatprep.subr.mxu0 0.0
        %843 = vmatpush1.msra.mxu0 0.0
        %844 = vmatprep.subr.mxu0 0.0
        %845 = vmatpush1.msra.mxu0 0.0
        %846 = vmatprep.subr.mxu0 0.0
        %847 = vmatpush1.msra.mxu0 0.0
        %848 = vmatprep.subr.mxu0 0.0
        %849 = vmatpush1.msra.mxu0 0.0
        %850 = vmatprep.subr.mxu0 0.0
        %851 = vmatpush1.msra.mxu0 0.0
        %852 = vmatprep.subr.mxu0 0.0
        %853 = vmatpush1.msra.mxu0 0.0
        %854 = vmatprep.subr.mxu0 0.0
        %855 = vmatpush1.msra.mxu0 0.0
        %856 = vmatprep.subr.mxu0 0.0
        %857 = vmatpush1.msra.mxu0 0.0
        %858 = vmatprep.subr.mxu0 0.0
        %859 = vmatpush1.msra.mxu0 0.0
        %860 = vmatprep.subr.mxu0 0.0
        %861 = vmatpush1.msra.mxu0 0.0
        %862 = vmatprep.mubr.f32.mxu0 0.0
        %863 = vmatmul.mubr.f32.gmra.mrb[0].mxu0 %v766
        %v864 = vpop.f32.mrb[0].mxu0
        %v865 = vadd.f32 0.0, %v864
        %v866 = vpop.f32.mrb[0].mxu0
        %867 = vmatprep.mubr.f32.mxu0 0.0
        %868 = vmatmul.mubr.f32.gmra.mrb[0].mxu0 %v767
        %v869 = vpop.f32.mrb[0].mxu0
        %v870 = vadd.f32 0.0, %v869
        %v871 = vpop.f32.mrb[0].mxu0
        %872 = vmatprep.mubr.f32.mxu0 0.0
        %873 = vmatmul.mubr.f32.gmra.mrb[0].mxu0 %v768
        %v874 = vpop.f32.mrb[0].mxu0
        %v875 = vadd.f32 0.0, %v874
        %v876 = vpop.f32.mrb[0].mxu0
        %877 = vmatprep.mubr.f32.mxu0 0.0
        %878 = vmatmul.mubr.f32.gmra.mrb[0].mxu0 %v769
        %v879 = vpop.f32.mrb[0].mxu0
        %v880 = vadd.f32 0.0, %v879
        %v881 = vpop.f32.mrb[0].mxu0
        %882 = vmatprep.mubr.f32.mxu0 0.0
        %883 = vmatmul.mubr.f32.gmra.mrb[0].mxu0 %v770
        %v884 = vpop.f32.mrb[0].mxu0
        %v885 = vadd.f32 0.0, %v884
        %v886 = vpop.f32.mrb[0].mxu0
        %887 = vmatprep.mubr.f32.mxu0 0.0
        %888 = vmatmul.mubr.f32.gmra.mrb[0].mxu0 %v771
        %v889 = vpop.f32.mrb[0].mxu0
        %v890 = vadd.f32 0.0, %v889
        %v891 = vpop.f32.mrb[0].mxu0
        %892 = vmatprep.mubr.f32.mxu0 0.0
        %893 = vmatmul.mubr.f32.gmra.mrb[0].mxu0 %v772
        %v894 = vpop.f32.mrb[0].mxu0
        %v895 = vadd.f32 0.0, %v894
        %v896 = vpop.f32.mrb[0].mxu0
        %897 = vmatprep.mubr.f32.mxu0 0.0
        %898 = vmatmul.mubr.f32.gmra.mrb[0].mxu0 %v773
        %v899 = vpop.f32.mrb[0].mxu0
        %v900 = vadd.f32 0.0, %v899
        %v901 = vpop.f32.mrb[0].mxu0
        %902 = vmatprep.mubr.f32.mxu0 0.0
        %903 = vmatmul.mubr.f32.gmra.mrb[0].mxu0 %v774
        %v904 = vpop.f32.mrb[0].mxu0
        %v905 = vadd.f32 0.0, %v904
        %v906 = vpop.f32.mrb[0].mxu0
        %907 = vmatprep.mubr.f32.mxu0 0.0
        %908 = vmatmul.mubr.f32.gmra.mrb[0].mxu0 %v775
        %v909 = vpop.f32.mrb[0].mxu0
        %v910 = vadd.f32 0.0, %v909
        %v911 = vpop.f32.mrb[0].mxu0
        %912 = vmatprep.mubr.f32.mxu0 0.0
        %913 = vmatmul.mubr.f32.gmra.mrb[0].mxu0 %v776
        %v914 = vpop.f32.mrb[0].mxu0
        %v915 = vadd.f32 0.0, %v914
        %v916 = vpop.f32.mrb[0].mxu0
        %917 = vmatprep.mubr.f32.mxu0 0.0
        %918 = vmatmul.mubr.f32.gmra.mrb[0].mxu0 %v777
        %v919 = vpop.f32.mrb[0].mxu0
        %v920 = vadd.f32 0.0, %v919
        %v921 = vpop.f32.mrb[0].mxu0
        %922 = vmatprep.mubr.f32.mxu0 0.0
        %923 = vmatmul.mubr.f32.gmra.mrb[0].mxu0 %v778
        %v924 = vpop.f32.mrb[0].mxu0
        %v925 = vadd.f32 0.0, %v924
        %v926 = vpop.f32.mrb[0].mxu0
        %927 = vmatprep.mubr.f32.mxu0 0.0
        %928 = vmatmul.mubr.f32.gmra.mrb[0].mxu0 %v779
        %v929 = vpop.f32.mrb[0].mxu0
        %v930 = vadd.f32 0.0, %v929
        %v931 = vpop.f32.mrb[0].mxu0
        %932 = vmatprep.mubr.f32.mxu0 0.0
        %933 = vmatmul.mubr.f32.gmra.mrb[0].mxu0 %v780
        %v934 = vpop.f32.mrb[0].mxu0
        %v935 = vadd.f32 0.0, %v934
        %v936 = vpop.f32.mrb[0].mxu0
        %937 = vmatprep.mubr.f32.mxu0 0.0
        %938 = vmatmul.mubr.f32.gmra.mrb[0].mxu0 %v781
        %v939 = vpop.f32.mrb[0].mxu0
        %v940 = vadd.f32 0.0, %v939
        %v941 = vpop.f32.mrb[0].mxu0
        %942 = vmatprep.mubr.f32.mxu0 0.0
        %943 = vmatmul.mubr.f32.gmra.mrb[0].mxu0 %v782
        %v944 = vpop.f32.mrb[0].mxu0
        %v945 = vadd.f32 0.0, %v944
        %v946 = vpop.f32.mrb[0].mxu0
        %947 = vmatprep.mubr.f32.mxu0 0.0
        %948 = vmatmul.mubr.f32.gmra.mrb[0].mxu0 %v783
        %v949 = vpop.f32.mrb[0].mxu0
        %v950 = vadd.f32 0.0, %v949
        %v951 = vpop.f32.mrb[0].mxu0
        %952 = vmatprep.mubr.f32.mxu0 0.0
        %953 = vmatmul.mubr.f32.gmra.mrb[0].mxu0 %v784
        %v954 = vpop.f32.mrb[0].mxu0
        %v955 = vadd.f32 0.0, %v954
        %v956 = vpop.f32.mrb[0].mxu0
        %957 = vmatprep.mubr.f32.mxu0 0.0
        %958 = vmatmul.mubr.f32.gmra.mrb[0].mxu0 %v785
        %v959 = vpop.f32.mrb[0].mxu0
        %v960 = vadd.f32 0.0, %v959
        %v961 = vpop.f32.mrb[0].mxu0
        %962 = vmatprep.mubr.f32.mxu0 0.0
        %963 = vmatmul.mubr.f32.gmra.mrb[0].mxu0 %v786
        %v964 = vpop.f32.mrb[0].mxu0
        %v965 = vadd.f32 0.0, %v964
        %v966 = vpop.f32.mrb[0].mxu0
        %967 = vmatprep.mubr.f32.mxu0 0.0
        %968 = vmatmul.mubr.f32.gmra.mrb[0].mxu0 %v787
        %v969 = vpop.f32.mrb[0].mxu0
        %v970 = vadd.f32 0.0, %v969
        %v971 = vpop.f32.mrb[0].mxu0
        %972 = vmatprep.mubr.f32.mxu0 0.0
        %973 = vmatmul.mubr.f32.gmra.mrb[0].mxu0 %v788
        %v974 = vpop.f32.mrb[0].mxu0
        %v975 = vadd.f32 0.0, %v974
        %v976 = vpop.f32.mrb[0].mxu0
        %977 = vmatprep.mubr.f32.mxu0 0.0
        %978 = vmatmul.mubr.f32.gmra.mrb[0].mxu0 %v789
        %v979 = vpop.f32.mrb[0].mxu0
        %v980 = vadd.f32 0.0, %v979
        %v981 = vpop.f32.mrb[0].mxu0
        %982 = vmatprep.mubr.f32.mxu0 0.0
        %983 = vmatmul.mubr.f32.gmra.mrb[0].mxu0 %v790
        %v984 = vpop.f32.mrb[0].mxu0
        %v985 = vadd.f32 0.0, %v984
        %v986 = vpop.f32.mrb[0].mxu0
        %987 = vmatprep.mubr.f32.mxu0 0.0
        %988 = vmatmul.mubr.f32.gmra.mrb[0].mxu0 %v791
        %v989 = vpop.f32.mrb[0].mxu0
        %v990 = vadd.f32 0.0, %v989
        %v991 = vpop.f32.mrb[0].mxu0
        %992 = vmatprep.mubr.f32.mxu0 0.0
        %993 = vmatmul.mubr.f32.gmra.mrb[0].mxu0 %v792
        %v994 = vpop.f32.mrb[0].mxu0
        %v995 = vadd.f32 0.0, %v994
        %v996 = vpop.f32.mrb[0].mxu0
        %997 = vmatprep.mubr.f32.mxu0 0.0
        %998 = vmatmul.mubr.f32.gmra.mrb[0].mxu0 %v793
        %v999 = vpop.f32.mrb[0].mxu0
        %v1000 = vadd.f32 0.0, %v999
        %v1001 = vpop.f32.mrb[0].mxu0
        %1002 = vmatprep.mubr.f32.mxu0 0.0
        %1003 = vmatmul.mubr.f32.gmra.mrb[0].mxu0 %v794
        %v1004 = vpop.f32.mrb[0].mxu0
        %v1005 = vadd.f32 0.0, %v1004
        %v1006 = vpop.f32.mrb[0].mxu0
        %1007 = vmatprep.mubr.f32.mxu0 0.0
        %1008 = vmatmul.mubr.f32.gmra.mrb[0].mxu0 %v795
        %v1009 = vpop.f32.mrb[0].mxu0
        %v1010 = vadd.f32 0.0, %v1009
        %v1011 = vpop.f32.mrb[0].mxu0
        %1012 = vmatprep.mubr.f32.mxu0 0.0
        %1013 = vmatmul.mubr.f32.gmra.mrb[0].mxu0 %v796
        %v1014 = vpop.f32.mrb[0].mxu0
        %v1015 = vadd.f32 0.0, %v1014
        %v1016 = vpop.f32.mrb[0].mxu0
        %1017 = vmatprep.mubr.f32.mxu0 0.0
        %1018 = vmatmul.mubr.f32.gmra.mrb[0].mxu0 %v797
        %v1019 = vpop.f32.mrb[0].mxu0
        %v1020 = vadd.f32 0.0, %v1019
        %v1021 = vpop.f32.mrb[0].mxu0
        %1022 = vdwg.mxu0
        %vm1023 = vcmask 261120
        %1024 = vst.msk [vmem:[%s274] sm:$0xff] %vm1023, %v865
        %1025 = vst.msk [vmem:[%s274 + $0x8] sm:$0xff] %vm1023, %v870
        %1026 = vst.msk [vmem:[%s274 + $0x10] sm:$0xff] %vm1023, %v875
        %1027 = vst.msk [vmem:[%s274 + $0x18] sm:$0xff] %vm1023, %v880
        %1028 = vst.msk [vmem:[%s274 + $0x20] sm:$0xff] %vm1023, %v885
        %1029 = vst.msk [vmem:[%s274 + $0x28] sm:$0xff] %vm1023, %v890
        %1030 = vst.msk [vmem:[%s274 + $0x30] sm:$0xff] %vm1023, %v895
        %1031 = vst.msk [vmem:[%s274 + $0x38] sm:$0xff] %vm1023, %v900
        %1032 = vst.msk [vmem:[%s274 + $0x40] sm:$0xff] %vm1023, %v905
        %1033 = vst.msk [vmem:[%s274 + $0x48] sm:$0xff] %vm1023, %v910
        %1034 = vst.msk [vmem:[%s274 + $0x50] sm:$0xff] %vm1023, %v915
        %1035 = vst.msk [vmem:[%s274 + $0x58] sm:$0xff] %vm1023, %v920
        %1036 = vst.msk [vmem:[%s274 + $0x60] sm:$0xff] %vm1023, %v925
        %1037 = vst.msk [vmem:[%s274 + $0x68] sm:$0xff] %vm1023, %v930
        %1038 = vst.msk [vmem:[%s274 + $0x70] sm:$0xff] %vm1023, %v935
        %1039 = vst.msk [vmem:[%s274 + $0x78] sm:$0xff] %vm1023, %v940
        %1040 = vst.msk [vmem:[%s274 + $0x80] sm:$0xff] %vm1023, %v945
        %1041 = vst.msk [vmem:[%s274 + $0x88] sm:$0xff] %vm1023, %v950
        %1042 = vst.msk [vmem:[%s274 + $0x90] sm:$0xff] %vm1023, %v955
        %1043 = vst.msk [vmem:[%s274 + $0x98] sm:$0xff] %vm1023, %v960
        %1044 = vst.msk [vmem:[%s274 + $0xa0] sm:$0xff] %vm1023, %v965
        %1045 = vst.msk [vmem:[%s274 + $0xa8] sm:$0xff] %vm1023, %v970
        %1046 = vst.msk [vmem:[%s274 + $0xb0] sm:$0xff] %vm1023, %v975
        %1047 = vst.msk [vmem:[%s274 + $0xb8] sm:$0xff] %vm1023, %v980
        %1048 = vst.msk [vmem:[%s274 + $0xc0] sm:$0xff] %vm1023, %v985
        %1049 = vst.msk [vmem:[%s274 + $0xc8] sm:$0xff] %vm1023, %v990
        %1050 = vst.msk [vmem:[%s274 + $0xd0] sm:$0xff] %vm1023, %v995
        %1051 = vst.msk [vmem:[%s274 + $0xd8] sm:$0xff] %vm1023, %v1000
        %1052 = vst.msk [vmem:[%s274 + $0xe0] sm:$0xff] %vm1023, %v1005
        %1053 = vst.msk [vmem:[%s274 + $0xe8] sm:$0xff] %vm1023, %v1010
        %1054 = vst.msk [vmem:[%s274 + $0xf0] sm:$0xff] %vm1023, %v1015
        %1055 = vst.msk [vmem:[%s274 + $0xf8] sm:$0xff] %vm1023, %v1020
        %s1056 = sand.u32 %s163, 1
        %s1057 = scalar_lea.sflag [#allocation3], %s1056
        %s1058 = sand.u32 %s163, 1
        %s1059 = smul.addr %s1058, 256
        %s1060 = scalar_lea.vmem [#allocation2], %s1059
        // Predicated region
        $region41: #{deconding_block_forward.7} parent=39 // pred_check
          %p1061 = pneg %p173
        $region42: #{deconding_block_forward.7} parent=39 // pred_check_branch
          %1063 = sbr.rel (%p1061) target = $region44
        $region43: #{deconding_block_forward.7} parent=39 // pred_region
          %s1064 = smul.u32 32, %s24
          %s1066 = ssub.s32 4096, 4096
          %1067 = vsyncadd %s1057, %s1066
          %s1068 = smul.addr %s23, 32
          %s1069 = sadd.s32 %s1064, %s1068
          %s1070 = smul.addr %s1069, 128
          %s1071 = scalar_lea.hbm %s5, %s1070
          %s1072 = sshll.u32 %s1060, 4
          %s1073 = int_to_ptr.vmem [resolvable:$true] %s1072
          %1078 = dma.vmem_to_hbm [thread:$0]  %s1073, 4096, %s1071, %s1057, 128, 128, 8
        $region44: #{deconding_block_forward.7} parent=39 // pred_fallthru
          _
      $region40: #{deconding_block_forward.7} parent=5 // pred_fallthru
        _
      %p1079 = scmp.le.s32.totalorder 2, %s14
      // Predicated region
      $region45: #{deconding_block_forward.7} parent=5 // pred_check
        %p1080 = pneg %p1079
      $region46: #{deconding_block_forward.7} parent=5 // pred_check_branch
        %1082 = sbr.rel (%p1080) target = $region48
      $region47: #{deconding_block_forward.7} parent=5 // pred_region
        %s1083 = ssub.s32 %s14, 2
        // Predicated region
        $region49: #{deconding_block_forward.7} parent=47 // pred_check
          %p1084 = pneg %p179
        $region50: #{deconding_block_forward.7} parent=47 // pred_check_branch
          %1086 = sbr.rel (%p1084) target = $region52
        $region51: #{deconding_block_forward.7} parent=47 // pred_region
          %s1087 = sand.u32 %s164, 1
          %s1088 = scalar_lea.sflag [#allocation3], %s1087
          %s1089 = sand.u32 %s164, 1
          %s1090 = smul.addr %s1089, 256
          %s1091 = scalar_lea.vmem [#allocation2], %s1090
          %1092 = dma.done %s1088, 4096
        $region52: #{deconding_block_forward.7} parent=47 // pred_fallthru
          _
      $region48: #{deconding_block_forward.7} parent=5 // pred_fallthru
        _
    $region6: #{deconding_block_forward.7} parent=1 // loop_footer
      %s18 = sadd.s32 1, %s14
    $region7: #{deconding_block_forward.7} parent=1 // loop_footer_branch
      %13 = sbr.rel target = $region3
    $region8: #{deconding_block_forward.7} parent=1 // loop_exit
      _
    %1093 = vsyncpa [#allocation3], 1
    %s1094 = scalar_lea.sflag [#allocation3], 1
    %1095 = vsyncpa %s1094, 1

</llo_original>
